<compile_context>
chip_gen: v7x
topology: tpu7x:2x2x1
jax: 0.10.0
libtpu: 0.0.40
codegen_flags: <defaults>
</compile_context>

<pallas_src>
import jax
import jax.numpy as jnp
from jax.experimental import pallas as pl
from jax.experimental.pallas import tpu as pltpu

_EDGE_TILE = 256   # fills the 2x256^2 MXU on v6e/v7x; on v5e 128 already fills M (minor cost only)


def _round_up(v, m):
    return (v + m - 1) // m * m


# --------------------------------------------------------------------------------------
# Shared edge pipeline: edge-net -> gather x_src -> per-edge x_j @ W_e -> scatter-add
# --------------------------------------------------------------------------------------
def _edge_messages_accumulate(ea_ref, src_ref, dst_ref, x_ref,
                              wa_ref, ba_ref, wb_ref, bb_ref, ex_ref, rd_ref, acc_ref):
    te = ea_ref.shape[0]
    n_p = x_ref.shape[0]

    # Edge network: Linear(1,64)+ReLU as a VPU outer product (K=1, no MXU pass),
    # then Linear(64, fin*fout) on the MXU with bf16 operands / f32 accumulation.
    h = jnp.maximum(ea_ref[...] * wa_ref[...] + ba_ref[...], 0.0)                   # [te, 64] f32
    we = jnp.dot(h.astype(jnp.bfloat16), wb_ref[...],
                 preferred_element_type=jnp.float32) + bb_ref[...]                  # [te, fio] f32

    # Gather x_{src(e)}: one-hot selector built in VMEM from int32 ids (bf16 is exact for 0/1).
    gsel = (src_ref[...] ==
            jax.lax.broadcasted_iota(jnp.int32, (te, n_p), 1)).astype(jnp.bfloat16)  # [te, n_p]
    x_src = jnp.dot(gsel, x_ref[...].astype(jnp.bfloat16),
                    preferred_element_type=jnp.float32)                              # [te, fin]

    # Per-edge x_j @ W_e: expand (MXU) -> full-lane multiply (VPU, f32) -> reduce over fin (MXU).
    x_rep = jnp.dot(x_src.astype(jnp.bfloat16), ex_ref[...],
                    preferred_element_type=jnp.float32)                              # [te, fio]
    msg = jnp.dot((x_rep * we).astype(jnp.bfloat16), rd_ref[...],
                  preferred_element_type=jnp.float32)                                # [te, fout]

    # Scatter-add into the resident node accumulator; padded edges carry dst == -1 (no match).
    ssel = (jax.lax.broadcasted_iota(jnp.int32, (n_p, te), 0)
            == dst_ref[...]).astype(jnp.bfloat16)                                    # [n_p, te]
    acc_ref[...] += jnp.dot(ssel, msg.astype(jnp.bfloat16),
                            preferred_element_type=jnp.float32)


# --------------------------------------------------------------------------------------
# NNConv(aggr='mean') + ReLU   (grid = (edge_tiles,), "arbitrary" reduction axis)
# --------------------------------------------------------------------------------------
def _nnconv_kernel(ea_ref, src_ref, dst_ref, x_ref, inv_deg_ref,
                   wa_ref, ba_ref, wb_ref, bb_ref, ex_ref, rd_ref, root_ref, rb_ref,
                   out_ref):
    k = pl.program_id(0)

    @pl.when(k == 0)
    def _init():
        out_ref[...] = jnp.zeros_like(out_ref)

    _edge_messages_accumulate(ea_ref, src_ref, dst_ref, x_ref,
                              wa_ref, ba_ref, wb_ref, bb_ref, ex_ref, rd_ref, out_ref)

    @pl.when(k == pl.num_programs(0) - 1)
    def _finalize():
        agg = out_ref[...] * inv_deg_ref[...]                                    # mean aggregation
        root = jnp.dot(x_ref[...], root_ref[...], preferred_element_type=jnp.float32)
        out_ref[...] = jnp.maximum(agg + root + rb_ref[...], 0.0)                # NNConv + ReLU


# --------------------------------------------------------------------------------------
# NNConv + ReLU fused with global_mean_pool + Dropout(identity) + Linear/ReLU + Linear
# --------------------------------------------------------------------------------------
def _nnconv_head_kernel(ea_ref, src_ref, dst_ref, x_ref, inv_deg_ref,
                        wa_ref, ba_ref, wb_ref, bb_ref, ex_ref, rd_ref, root_ref, rb_ref,
                        batch_ref, inv_cnt_ref, l1w_ref, l1b_ref, l2w_ref, l2b_ref,
                        out_ref, acc_ref):
    k = pl.program_id(0)

    @pl.when(k == 0)
    def _init():
        acc_ref[...] = jnp.zeros_like(acc_ref)
        out_ref[...] = jnp.zeros_like(out_ref)

    _edge_messages_accumulate(ea_ref, src_ref, dst_ref, x_ref,
                              wa_ref, ba_ref, wb_ref, bb_ref, ex_ref, rd_ref, acc_ref)

    @pl.when(k == pl.num_programs(0) - 1)
    def _finalize():
        agg = acc_ref[...] * inv_deg_ref[...]
        root = jnp.dot(x_ref[...], root_ref[...], preferred_element_type=jnp.float32)
        h2 = jnp.maximum(agg + root + rb_ref[...], 0.0)                          # conv2 + ReLU

        g_p, n_p = out_ref.shape[0], h2.shape[0]
        sel = (jax.lax.broadcasted_iota(jnp.int32, (g_p, n_p), 0)
               == batch_ref[...]).astype(jnp.float32)
        pooled = jnp.dot(sel * inv_cnt_ref[...], h2,
                         preferred_element_type=jnp.float32)                     # global_mean_pool
        # Dropout(p=0.3) is identity in eval/inference mode.
        # TODO(synk): training-mode stochastic dropout (pltpu.prng_*) not implemented.
        g = jnp.maximum(jnp.dot(pooled, l1w_ref[...], preferred_element_type=jnp.float32)
                        + l1b_ref[...], 0.0)
        out_ref[...] = jnp.dot(g, l2w_ref[...], preferred_element_type=jnp.float32) + l2b_ref[...]


# --------------------------------------------------------------------------------------
# Wrappers
# --------------------------------------------------------------------------------------
def _expand_reduce(fin, fout):
    """Constant expand/reduce operators so the per-edge [fin,fout] contraction becomes
    matmul + one unmasked full-lane multiply + matmul. 0/1 valued, so bf16 is exact."""
    fio = fin * fout
    j = jnp.arange(fio)
    expand_m = (j[None, :] // fout == jnp.arange(fin)[:, None]).astype(jnp.bfloat16)  # [fin, fio]
    reduce_m = (j[:, None] % fout == jnp.arange(fout)[None, :]).astype(jnp.bfloat16)  # [fio, fout]
    return expand_m, reduce_m


def _conv_specs(te, n_p, fin, fio, fout):
    return [
        pl.BlockSpec((te, 1), lambda k: (k, 0)),      # edge_attr tile
        pl.BlockSpec((te, 1), lambda k: (k, 0)),      # src ids tile
        pl.BlockSpec((1, te), lambda k: (0, k)),      # dst ids tile (lane-major)
        pl.BlockSpec((n_p, fin), lambda k: (0, 0)),   # x (all nodes, gather source + root term)
        pl.BlockSpec((n_p, 1), lambda k: (0, 0)),     # 1/in-degree (mean aggregation)
        pl.BlockSpec((1, 64), lambda k: (0, 0)),      # wa
        pl.BlockSpec((1, 64), lambda k: (0, 0)),      # ba
        pl.BlockSpec((64, fio), lambda k: (0, 0)),    # wb (bf16)
        pl.BlockSpec((1, fio), lambda k: (0, 0)),     # bb
        pl.BlockSpec((fin, fio), lambda k: (0, 0)),   # expand operator (bf16)
        pl.BlockSpec((fio, fout), lambda k: (0, 0)),  # reduce operator (bf16)
        pl.BlockSpec((fin, fout), lambda k: (0, 0)),  # root weight
        pl.BlockSpec((1, fout), lambda k: (0, 0)),    # root bias
    ]


def _conv_cost_numbers(e_p, n_p, fin, fio, fout):
    flops = e_p * (3 * 64                      # edge-net outer product + relu
                   + 2 * 64 * fio              # edge-net second linear
                   + 2 * n_p * fin             # one-hot gather matmul
                   + 2 * fin * fio             # expand matmul
                   + fio                       # elementwise multiply
                   + 2 * fio * fout            # reduce matmul
                   + 2 * n_p * fout)           # one-hot scatter matmul
    flops += 2 * n_p * fin * fout + 4 * n_p * fout          # root term + finalize
    bytes_accessed = (4 * (n_p * fin + n_p + n_p * fout + fio + fout + fin * fout + 2 * 64)
                      + 4 * 3 * e_p                                          # ea/src/dst
                      + 2 * (64 * fio + fin * fio + fio * fout))             # bf16 operands
    return int(flops), int(bytes_accessed)


def _vmem_limit_bytes(te, n_p, fio):
    # Dominant working set: a few [te, fio] f32 intermediates, the [te, n_p]/[n_p, te] selectors,
    # the lane-padded 1-wide edge vectors, and the bf16 weight operators; 2x headroom, clamped to
    # [16 MiB, 32 MiB] so it never asks for all of v7x's 64 MiB physical VMEM.
    need = 2 * (6 * te * fio * 4 + 2 * te * n_p * 4 + 4 * te * 128 * 4 + 4 * 64 * fio * 2)
    return int(min(32 * 2 ** 20, max(16 * 2 ** 20, need)))


def nnconv_relu(x, edge_attr, src, dst, inv_deg, wa, ba, wb, bb, root, rbias):
    """relu(NNConv(x)) on padded tensors: x [n_p,fin], edge_attr/src [e_p,1], dst [1,e_p]."""
    n_p, fin = x.shape
    fout = root.shape[1]
    fio = fin * fout
    e_p = edge_attr.shape[0]
    te = _EDGE_TILE
    assert e_p % te == 0 and wb.shape == (64, fio)

    expand_m, reduce_m = _expand_reduce(fin, fout)
    flops, bytes_accessed = _conv_cost_numbers(e_p, n_p, fin, fio, fout)

    return pl.pallas_call(
        _nnconv_kernel,
        out_shape=jax.ShapeDtypeStruct((n_p, fout), jnp.float32),
        grid=(e_p // te,),
        in_specs=_conv_specs(te, n_p, fin, fio, fout),
        out_specs=pl.BlockSpec((n_p, fout), lambda k: (0, 0)),
        compiler_params=pltpu.CompilerParams(
            dimension_semantics=("arbitrary",),
            vmem_limit_bytes=_vmem_limit_bytes(te, n_p, fio)),
        cost_estimate=pl.CostEstimate(flops=flops, transcendentals=0,
                                      bytes_accessed=bytes_accessed),
    )(edge_attr, src, dst, x, inv_deg, wa, ba, wb.astype(jnp.bfloat16), bb,
      expand_m, reduce_m, root, rbias)


def nnconv_relu_head(x, edge_attr, src, dst, inv_deg, wa, ba, wb, bb, root, rbias,
                     batch_row, inv_cnt, l1w, l1b, l2w_p, l2b_p):
    """conv2 + relu fused with global_mean_pool + (identity dropout) + lin1+relu + lin2."""
    n_p, fin = x.shape
    fout = root.shape[1]
    fio = fin * fout
    e_p = edge_attr.shape[0]
    te = _EDGE_TILE
    g_p = inv_cnt.shape[0]
    c_p = l2w_p.shape[1]
    hidden = fout
    assert e_p % te == 0 and wb.shape == (64, fio)

    expand_m, reduce_m = _expand_reduce(fin, fout)
    flops, bytes_accessed = _conv_cost_numbers(e_p, n_p, fin, fio, fout)
    flops += 2 * g_p * n_p * hidden + 2 * g_p * hidden * hidden + 2 * g_p * hidden * c_p
    bytes_accessed += 4 * (n_p + g_p + hidden * hidden + hidden + hidden * c_p + c_p + g_p * c_p)

    head_specs = [
        pl.BlockSpec((1, n_p), lambda k: (0, 0)),           # batch ids
        pl.BlockSpec((g_p, 1), lambda k: (0, 0)),           # 1/count per graph
        pl.BlockSpec((hidden, hidden), lambda k: (0, 0)),   # lin1 weight
        pl.BlockSpec((1, hidden), lambda k: (0, 0)),        # lin1 bias
        pl.BlockSpec((hidden, c_p), lambda k: (0, 0)),      # lin2 weight (lane padded)
        pl.BlockSpec((1, c_p), lambda k: (0, 0)),           # lin2 bias (lane padded)
    ]

    return pl.pallas_call(
        _nnconv_head_kernel,
        out_shape=jax.ShapeDtypeStruct((g_p, c_p), jnp.float32),
        grid=(e_p // te,),
        in_specs=_conv_specs(te, n_p, fin, fio, fout) + head_specs,
        out_specs=pl.BlockSpec((g_p, c_p), lambda k: (0, 0)),
        scratch_shapes=[pltpu.VMEM((n_p, fout), jnp.float32)],   # node accumulator
        compiler_params=pltpu.CompilerParams(
            dimension_semantics=("arbitrary",),
            vmem_limit_bytes=_vmem_limit_bytes(te, n_p, fio)),
        cost_estimate=pl.CostEstimate(flops=int(flops), transcendentals=0,
                                      bytes_accessed=int(bytes_accessed)),
    )(edge_attr, src, dst, x, inv_deg, wa, ba, wb.astype(jnp.bfloat16), bb,
      expand_m, reduce_m, root, rbias,
      batch_row, inv_cnt, l1w, l1b, l2w_p, l2b_p)


# --------------------------------------------------------------------------------------
# Full forward pass (plain-JAX glue only pads and builds O(N+E) index/degree tensors)
# --------------------------------------------------------------------------------------
def edge_attr_gnn(x, edge_index, edge_attr, batch, params, num_graphs):
    n, fin = x.shape
    e = edge_attr.shape[0]
    hidden = params['root1'].shape[1]
    num_classes = params['l2w'].shape[1]

    n_p = _round_up(n, 8)
    e_p = _round_up(e, _EDGE_TILE)
    g_p = _round_up(num_graphs, 8)
    c_p = _round_up(num_classes, 128)   # lane-dense final store; sliced below

    src = edge_index[0].astype(jnp.int32)
    dst = edge_index[1].astype(jnp.int32)

    # Padding contract: real src/dst in [0, n), batch in [0, num_graphs); padded slots carry -1
    # sentinels so they match no selector row and contribute nothing.
    x_p = jnp.zeros((n_p, fin), jnp.float32).at[:n].set(x.astype(jnp.float32))
    ea_p = jnp.zeros((e_p, 1), jnp.float32).at[:e].set(edge_attr.astype(jnp.float32))
    src_p = jnp.full((e_p, 1), -1, jnp.int32).at[:e, 0].set(src)
    dst_p = jnp.full((1, e_p), -1, jnp.int32).at[0, :e].set(dst)
    deg = jnp.zeros((n_p,), jnp.float32).at[dst].add(1.0)
    inv_deg = (1.0 / jnp.maximum(deg, 1.0))[:, None]                 # [n_p, 1] mean aggregation
    batch_row = jnp.full((1, n_p), -1, jnp.int32).at[0, :n].set(batch.astype(jnp.int32))
    cnt = jnp.zeros((g_p,), jnp.float32).at[batch].add(1.0)
    inv_cnt = (1.0 / jnp.maximum(cnt, 1.0))[:, None]                 # [g_p, 1]
    l2w_p = jnp.zeros((hidden, c_p), jnp.float32).at[:, :num_classes].set(params['l2w'])
    l2b_p = jnp.zeros((1, c_p), jnp.float32).at[:, :num_classes].set(params['l2b'])

    h1 = nnconv_relu(x_p, ea_p, src_p, dst_p, inv_deg,
                     params['w1a'], params['b1a'], params['w1b'], params['b1b'],
                     params['root1'], params['rb1'])
    out = nnconv_relu_head(h1, ea_p, src_p, dst_p, inv_deg,
                           params['w2a'], params['b2a'], params['w2b'], params['b2b'],
                           params['root2'], params['rb2'],
                           batch_row, inv_cnt, params['l1w'], params['l1b'], l2w_p, l2b_p)
    return out[:num_graphs, :num_classes]


# --------------------------------------------------------------------------------------
# Pure-JAX reference of the same forward pass (independent of the kernel machinery)
# --------------------------------------------------------------------------------------
def reference(x, edge_index, edge_attr, batch, params, num_graphs):
    src, dst = edge_index[0], edge_index[1]
    n = x.shape[0]

    def conv(xx, wa, ba, wb, bb, root, rbias):
        fi, fo = xx.shape[1], root.shape[1]
        h = jnp.maximum(edge_attr @ wa + ba, 0.0)
        we = (h @ wb + bb).reshape(-1, fi, fo)
        msg = jnp.einsum('ef,efo->eo', xx[src], we)
        summed = jnp.zeros((n, fo), jnp.float32).at[dst].add(msg)
        deg = jnp.zeros((n,), jnp.float32).at[dst].add(1.0)
        return summed / jnp.maximum(deg, 1.0)[:, None] + xx @ root + rbias

    h1 = jnp.maximum(conv(x, params['w1a'], params['b1a'], params['w1b'], params['b1b'],
                          params['root1'], params['rb1']), 0.0)
    h2 = jnp.maximum(conv(h1, params['w2a'], params['b2a'], params['w2b'], params['b2b'],
                          params['root2'], params['rb2']), 0.0)
    cnt = jnp.zeros((num_graphs,), jnp.float32).at[batch].add(1.0)
    g = jnp.zeros((num_graphs, h2.shape[1]), jnp.float32).at[batch].add(h2)
    g = g / jnp.maximum(cnt, 1.0)[:, None]
    g = jnp.maximum(g @ params['l1w'] + params['l1b'], 0.0)
    return g @ params['l2w'] + params['l2b']


if __name__ == "__main__":
    key = jax.random.PRNGKey(0)
    N, E, G = 48, 520, 2              # nodes, edges, graphs (520 edges -> 3 edge tiles of 256)
    FIN, H, C = 4, 32, 3              # input_feature, hidden_channels, num_classes
    ks = jax.random.split(key, 6)

    x = jax.random.normal(ks[0], (N, FIN), jnp.float32)
    edge_attr = jax.random.normal(ks[1], (E, 1), jnp.float32)

    # two graphs of 24 nodes each; edges stay inside their graph
    batch = jnp.repeat(jnp.arange(G), N // G).astype(jnp.int32)
    graph_of_edge = jnp.repeat(jnp.arange(G), E // G)
    src = jax.random.randint(ks[2], (E,), 0, N // G) + graph_of_edge * (N // G)
    dst = jax.random.randint(ks[3], (E,), 0, N // G) + graph_of_edge * (N // G)
    edge_index = jnp.stack([src, dst]).astype(jnp.int32)   # [2, E], PyG (source, target)

    def init(k, shape, scale):
        return scale * jax.random.normal(k, shape, jnp.float32)

    pk = jax.random.split(ks[4], 16)
    params = dict(
        # conv1 edge-nn: Linear(1,64) -> ReLU -> Linear(64, FIN*H); root weight + bias
        w1a=init(pk[0], (1, 64), 0.5), b1a=init(pk[1], (1, 64), 0.1),
        w1b=init(pk[2], (64, FIN * H), 0.1), b1b=init(pk[3], (1, FIN * H), 0.1),
        root1=init(pk[4], (FIN, H), 0.3), rb1=init(pk[5], (1, H), 0.1),
        # conv2 edge-nn: Linear(1,64) -> ReLU -> Linear(64, H*H); root weight + bias
        w2a=init(pk[6], (1, 64), 0.5), b2a=init(pk[7], (1, 64), 0.1),
        w2b=init(pk[8], (64, H * H), 0.05), b2b=init(pk[9], (1, H * H), 0.1),
        root2=init(pk[10], (H, H), 0.2), rb2=init(pk[11], (1, H), 0.1),
        # head: Linear(H,H), Linear(H,C)
        l1w=init(pk[12], (H, H), 0.2), l1b=init(pk[13], (1, H), 0.1),
        l2w=init(pk[14], (H, C), 0.2), l2b=init(pk[15], (1, C), 0.1),
    )

    out = jax.block_until_ready(edge_attr_gnn(x, edge_index, edge_attr, batch, params, G))

    with jax.default_matmul_precision("highest"):
        ref = reference(x, edge_index, edge_attr, batch, params, G)
    assert out.shape == (G, C)
    # bf16 MXU operands with f32 accumulation vs. an f32 'highest' reference.
    assert jnp.allclose(out, ref, atol=3e-3, rtol=3e-3), (out, ref)

    print("KERNEL_OK")
</pallas_src>

<mosaic_0001>
module attributes {stable_mosaic.version = 11 : i64} {
  func.func @_nnconv_kernel(%arg0: i32, %arg1: memref<256x1xf32, #tpu.memory_space<vmem>>, %arg2: memref<256x1xi32, #tpu.memory_space<vmem>>, %arg3: memref<1x256xi32, #tpu.memory_space<vmem>>, %arg4: memref<48x4xf32, #tpu.memory_space<vmem>>, %arg5: memref<48x1xf32, #tpu.memory_space<vmem>>, %arg6: memref<1x64xf32, #tpu.memory_space<vmem>>, %arg7: memref<1x64xf32, #tpu.memory_space<vmem>>, %arg8: memref<64x128xbf16, #tpu.memory_space<vmem>>, %arg9: memref<1x128xf32, #tpu.memory_space<vmem>>, %arg10: memref<4x128xbf16, #tpu.memory_space<vmem>>, %arg11: memref<128x32xbf16, #tpu.memory_space<vmem>>, %arg12: memref<4x32xf32, #tpu.memory_space<vmem>>, %arg13: memref<1x32xf32, #tpu.memory_space<vmem>>, %arg14: memref<48x32xf32, #tpu.memory_space<vmem>>) attributes {dimension_semantics = [#tpu.dimension_semantics<arbitrary>], iteration_bounds = array<i64: 3>, scalar_prefetch = 0 : i64, scratch_operands = 0 : i64, tpu.core_type = #tpu.core_type<tc>, window_params = [{transform_indices = @transform_0, window_bounds = array<i64: 256, 1>}, {transform_indices = @transform_1, window_bounds = array<i64: 256, 1>}, {transform_indices = @transform_2, window_bounds = array<i64: 1, 256>}, {pipeline_mode = #tpu.pipeline_mode<synchronous>, transform_indices = @transform_3, window_bounds = array<i64: 48, 4>}, {pipeline_mode = #tpu.pipeline_mode<synchronous>, transform_indices = @transform_4, window_bounds = array<i64: 48, 1>}, {pipeline_mode = #tpu.pipeline_mode<synchronous>, transform_indices = @transform_5, window_bounds = array<i64: 1, 64>}, {pipeline_mode = #tpu.pipeline_mode<synchronous>, transform_indices = @transform_6, window_bounds = array<i64: 1, 64>}, {pipeline_mode = #tpu.pipeline_mode<synchronous>, transform_indices = @transform_7, window_bounds = array<i64: 64, 128>}, {pipeline_mode = #tpu.pipeline_mode<synchronous>, transform_indices = @transform_8, window_bounds = array<i64: 1, 128>}, {pipeline_mode = #tpu.pipeline_mode<synchronous>, transform_indices = @transform_9, window_bounds = array<i64: 4, 128>}, {pipeline_mode = #tpu.pipeline_mode<synchronous>, transform_indices = @transform_10, window_bounds = array<i64: 128, 32>}, {pipeline_mode = #tpu.pipeline_mode<synchronous>, transform_indices = @transform_11, window_bounds = array<i64: 4, 32>}, {pipeline_mode = #tpu.pipeline_mode<synchronous>, transform_indices = @transform_12, window_bounds = array<i64: 1, 32>}, {pipeline_mode = #tpu.pipeline_mode<synchronous>, transform_indices = @transform_13, window_bounds = array<i64: 48, 32>}]} {
    %c0_i32 = arith.constant 0 : i32
    %0 = arith.cmpi eq, %arg0, %c0_i32 : i32
    %1 = arith.extui %0 : i1 to i32
    %c0_i32_0 = arith.constant 0 : i32
    %2 = arith.cmpi ne, %1, %c0_i32_0 : i32
    scf.if %2 {
      %cst_30 = arith.constant 0.000000e+00 : f32
      %51 = vector.broadcast %cst_30 : f32 to vector<48x32xf32>
      %c0_31 = arith.constant 0 : index
      %c0_32 = arith.constant 0 : index
      %52 = vector.load %arg14[%c0_31, %c0_32] : memref<48x32xf32, #tpu.memory_space<vmem>>, vector<48x32xf32>
      tpu.vector_store %arg14[%c0_31, %c0_32], %51 {strides = array<i32>} : memref<48x32xf32, #tpu.memory_space<vmem>>, vector<48x32xf32>,
    } else {
    }
    %c0 = arith.constant 0 : index
    %c0_1 = arith.constant 0 : index
    %3 = vector.load %arg1[%c0, %c0_1] : memref<256x1xf32, #tpu.memory_space<vmem>>, vector<256x1xf32>
    %c0_2 = arith.constant 0 : index
    %c0_3 = arith.constant 0 : index
    %4 = vector.load %arg6[%c0_2, %c0_3] : memref<1x64xf32, #tpu.memory_space<vmem>>, vector<1x64xf32>
    %5 = vector.broadcast %3 : vector<256x1xf32> to vector<256x64xf32>
    %6 = vector.broadcast %4 : vector<1x64xf32> to vector<256x64xf32>
    %7 = arith.mulf %5, %6 : vector<256x64xf32>
    %c0_4 = arith.constant 0 : index
    %c0_5 = arith.constant 0 : index
    %8 = vector.load %arg7[%c0_4, %c0_5] : memref<1x64xf32, #tpu.memory_space<vmem>>, vector<1x64xf32>
    %9 = vector.broadcast %8 : vector<1x64xf32> to vector<256x64xf32>
    %10 = arith.addf %7, %9 : vector<256x64xf32>
    %cst = arith.constant 0.000000e+00 : f32
    %11 = vector.broadcast %cst : f32 to vector<256x64xf32>
    %12 = arith.maximumf %10, %11 : vector<256x64xf32>
    %13 = arith.truncf %12 : vector<256x64xf32> to vector<256x64xbf16>
    %c0_6 = arith.constant 0 : index
    %c0_7 = arith.constant 0 : index
    %14 = vector.load %arg8[%c0_6, %c0_7] : memref<64x128xbf16, #tpu.memory_space<vmem>>, vector<64x128xbf16>
    %cst_8 = arith.constant dense<0.000000e+00> : vector<256x128xf32>
    %15 = tpu.matmul %13, %14, %cst_8 {dimension_numbers = #tpu.dot_dimension_numbers<[1], [0], [0], [1], [0, 0, 1, 1], [], []>} : vector<256x64xbf16>, vector<64x128xbf16>, vector<256x128xf32> -> vector<256x128xf32>
    %c0_9 = arith.constant 0 : index
    %c0_10 = arith.constant 0 : index
    %16 = vector.load %arg9[%c0_9, %c0_10] : memref<1x128xf32, #tpu.memory_space<vmem>>, vector<1x128xf32>
    %17 = vector.broadcast %16 : vector<1x128xf32> to vector<256x128xf32>
    %18 = arith.addf %15, %17 : vector<256x128xf32>
    %c0_11 = arith.constant 0 : index
    %c0_12 = arith.constant 0 : index
    %19 = vector.load %arg2[%c0_11, %c0_12] : memref<256x1xi32, #tpu.memory_space<vmem>>, vector<256x1xi32>
    %20 = tpu.iota {dimensions = array<i32: 1>} : vector<256x48xi32>
    %21 = vector.broadcast %19 : vector<256x1xi32> to vector<256x48xi32>
    %22 = arith.cmpi eq, %21, %20 : vector<256x48xi32>
    %23 = arith.extui %22 : vector<256x48xi1> to vector<256x48xi32>
    %24 = arith.sitofp %23 : vector<256x48xi32> to vector<256x48xf32>
    %25 = arith.truncf %24 : vector<256x48xf32> to vector<256x48xbf16>
    %c0_13 = arith.constant 0 : index
    %c0_14 = arith.constant 0 : index
    %26 = vector.load %arg4[%c0_13, %c0_14] : memref<48x4xf32, #tpu.memory_space<vmem>>, vector<48x4xf32>
    %27 = arith.truncf %26 : vector<48x4xf32> to vector<48x4xbf16>
    %cst_15 = arith.constant dense<0.000000e+00> : vector<256x4xf32>
    %28 = tpu.matmul %25, %27, %cst_15 {dimension_numbers = #tpu.dot_dimension_numbers<[1], [0], [0], [1], [0, 0, 1, 1], [], []>} : vector<256x48xbf16>, vector<48x4xbf16>, vector<256x4xf32> -> vector<256x4xf32>
    %29 = arith.truncf %28 : vector<256x4xf32> to vector<256x4xbf16>
    %c0_16 = arith.constant 0 : index
    %c0_17 = arith.constant 0 : index
    %30 = vector.load %arg10[%c0_16, %c0_17] : memref<4x128xbf16, #tpu.memory_space<vmem>>, vector<4x128xbf16>
    %cst_18 = arith.constant dense<0.000000e+00> : vector<256x128xf32>
    %31 = tpu.matmul %29, %30, %cst_18 {dimension_numbers = #tpu.dot_dimension_numbers<[1], [0], [0], [1], [0, 0, 1, 1], [], []>} : vector<256x4xbf16>, vector<4x128xbf16>, vector<256x128xf32> -> vector<256x128xf32>
    %32 = arith.mulf %31, %18 : vector<256x128xf32>
    %33 = arith.truncf %32 : vector<256x128xf32> to vector<256x128xbf16>
    %c0_19 = arith.constant 0 : index
    %c0_20 = arith.constant 0 : index
    %34 = vector.load %arg11[%c0_19, %c0_20] : memref<128x32xbf16, #tpu.memory_space<vmem>>, vector<128x32xbf16>
    %cst_21 = arith.constant dense<0.000000e+00> : vector<256x32xf32>
    %35 = tpu.matmul %33, %34, %cst_21 {dimension_numbers = #tpu.dot_dimension_numbers<[1], [0], [0], [1], [0, 0, 1, 1], [], []>} : vector<256x128xbf16>, vector<128x32xbf16>, vector<256x32xf32> -> vector<256x32xf32>
    %36 = tpu.iota {dimensions = array<i32: 0>} : vector<48x256xi32>
    %c0_22 = arith.constant 0 : index
    %c0_23 = arith.constant 0 : index
    %37 = vector.load %arg3[%c0_22, %c0_23] : memref<1x256xi32, #tpu.memory_space<vmem>>, vector<1x256xi32>
    %38 = vector.broadcast %37 : vector<1x256xi32> to vector<48x256xi32>
    %39 = arith.cmpi eq, %36, %38 : vector<48x256xi32>
    %40 = arith.extui %39 : vector<48x256xi1> to vector<48x256xi32>
    %41 = arith.sitofp %40 : vector<48x256xi32> to vector<48x256xf32>
    %42 = arith.truncf %41 : vector<48x256xf32> to vector<48x256xbf16>
    %c0_24 = arith.constant 0 : index
    %c0_25 = arith.constant 0 : index
    %43 = vector.load %arg14[%c0_24, %c0_25] : memref<48x32xf32, #tpu.memory_space<vmem>>, vector<48x32xf32>
    %44 = arith.truncf %35 : vector<256x32xf32> to vector<256x32xbf16>
    %cst_26 = arith.constant dense<0.000000e+00> : vector<48x32xf32>
    %45 = tpu.matmul %42, %44, %cst_26 {dimension_numbers = #tpu.dot_dimension_numbers<[1], [0], [0], [1], [0, 0, 1, 1], [], []>} : vector<48x256xbf16>, vector<256x32xbf16>, vector<48x32xf32> -> vector<48x32xf32>
    %46 = arith.addf %43, %45 : vector<48x32xf32>
    %c0_27 = arith.constant 0 : index
    %c0_28 = arith.constant 0 : index
    %47 = vector.load %arg14[%c0_27, %c0_28] : memref<48x32xf32, #tpu.memory_space<vmem>>, vector<48x32xf32>
    tpu.vector_store %arg14[%c0_27, %c0_28], %46 {strides = array<i32>} : memref<48x32xf32, #tpu.memory_space<vmem>>, vector<48x32xf32>,
    %c2_i32 = arith.constant 2 : i32
    %48 = arith.cmpi eq, %arg0, %c2_i32 : i32
    %49 = arith.extui %48 : i1 to i32
    %c0_i32_29 = arith.constant 0 : i32
    %50 = arith.cmpi ne, %49, %c0_i32_29 : i32
    scf.if %50 {
      %c0_30 = arith.constant 0 : index
      %c0_31 = arith.constant 0 : index
      %51 = vector.load %arg14[%c0_30, %c0_31] : memref<48x32xf32, #tpu.memory_space<vmem>>, vector<48x32xf32>
      %c0_32 = arith.constant 0 : index
      %c0_33 = arith.constant 0 : index
      %52 = vector.load %arg5[%c0_32, %c0_33] : memref<48x1xf32, #tpu.memory_space<vmem>>, vector<48x1xf32>
      %53 = vector.broadcast %52 : vector<48x1xf32> to vector<48x32xf32>
      %54 = arith.mulf %51, %53 : vector<48x32xf32>
      %c0_34 = arith.constant 0 : index
      %c0_35 = arith.constant 0 : index
      %55 = vector.load %arg4[%c0_34, %c0_35] : memref<48x4xf32, #tpu.memory_space<vmem>>, vector<48x4xf32>
      %c0_36 = arith.constant 0 : index
      %c0_37 = arith.constant 0 : index
      %56 = vector.load %arg12[%c0_36, %c0_37] : memref<4x32xf32, #tpu.memory_space<vmem>>, vector<4x32xf32>
      %cst_38 = arith.constant dense<0.000000e+00> : vector<48x32xf32>
      %57 = tpu.matmul %55, %56, %cst_38 {dimension_numbers = #tpu.dot_dimension_numbers<[1], [0], [0], [1], [0, 0, 1, 1], [], []>} : vector<48x4xf32>, vector<4x32xf32>, vector<48x32xf32> -> vector<48x32xf32>
      %58 = arith.addf %54, %57 : vector<48x32xf32>
      %c0_39 = arith.constant 0 : index
      %c0_40 = arith.constant 0 : index
      %59 = vector.load %arg13[%c0_39, %c0_40] : memref<1x32xf32, #tpu.memory_space<vmem>>, vector<1x32xf32>
      %60 = vector.broadcast %59 : vector<1x32xf32> to vector<48x32xf32>
      %61 = arith.addf %58, %60 : vector<48x32xf32>
      %cst_41 = arith.constant 0.000000e+00 : f32
      %62 = vector.broadcast %cst_41 : f32 to vector<48x32xf32>
      %63 = arith.maximumf %61, %62 : vector<48x32xf32>
      %c0_42 = arith.constant 0 : index
      %c0_43 = arith.constant 0 : index
      %64 = vector.load %arg14[%c0_42, %c0_43] : memref<48x32xf32, #tpu.memory_space<vmem>>, vector<48x32xf32>
      tpu.vector_store %arg14[%c0_42, %c0_43], %63 {strides = array<i32>} : memref<48x32xf32, #tpu.memory_space<vmem>>, vector<48x32xf32>,
    } else {
    }
    return
  }
  func.func @transform_0(%arg0: i32) -> (i32, i32) {
    %c0_i32 = arith.constant 0 : i32
    %c0_i32_0 = arith.constant 0 : i32
    return %arg0, %c0_i32 : i32, i32
  }
  func.func @transform_1(%arg0: i32) -> (i32, i32) {
    %c0_i32 = arith.constant 0 : i32
    %c0_i32_0 = arith.constant 0 : i32
    return %arg0, %c0_i32 : i32, i32
  }
  func.func @transform_2(%arg0: i32) -> (i32, i32) {
    %c0_i32 = arith.constant 0 : i32
    %c0_i32_0 = arith.constant 0 : i32
    return %c0_i32, %arg0 : i32, i32
  }
  func.func @transform_3(%arg0: i32) -> (i32, i32) {
    %c0_i32 = arith.constant 0 : i32
    %c0_i32_0 = arith.constant 0 : i32
    %c0_i32_1 = arith.constant 0 : i32
    return %c0_i32, %c0_i32_0 : i32, i32
  }
  func.func @transform_4(%arg0: i32) -> (i32, i32) {
    %c0_i32 = arith.constant 0 : i32
    %c0_i32_0 = arith.constant 0 : i32
    %c0_i32_1 = arith.constant 0 : i32
    return %c0_i32, %c0_i32_0 : i32, i32
  }
  func.func @transform_5(%arg0: i32) -> (i32, i32) {
    %c0_i32 = arith.constant 0 : i32
    %c0_i32_0 = arith.constant 0 : i32
    %c0_i32_1 = arith.constant 0 : i32
    return %c0_i32, %c0_i32_0 : i32, i32
  }
  func.func @transform_6(%arg0: i32) -> (i32, i32) {
    %c0_i32 = arith.constant 0 : i32
    %c0_i32_0 = arith.constant 0 : i32
    %c0_i32_1 = arith.constant 0 : i32
    return %c0_i32, %c0_i32_0 : i32, i32
  }
  func.func @transform_7(%arg0: i32) -> (i32, i32) {
    %c0_i32 = arith.constant 0 : i32
    %c0_i32_0 = arith.constant 0 : i32
    %c0_i32_1 = arith.constant 0 : i32
    return %c0_i32, %c0_i32_0 : i32, i32
  }
  func.func @transform_8(%arg0: i32) -> (i32, i32) {
    %c0_i32 = arith.constant 0 : i32
    %c0_i32_0 = arith.constant 0 : i32
    %c0_i32_1 = arith.constant 0 : i32
    return %c0_i32, %c0_i32_0 : i32, i32
  }
  func.func @transform_9(%arg0: i32) -> (i32, i32) {
    %c0_i32 = arith.constant 0 : i32
    %c0_i32_0 = arith.constant 0 : i32
    %c0_i32_1 = arith.constant 0 : i32
    return %c0_i32, %c0_i32_0 : i32, i32
  }
  func.func @transform_10(%arg0: i32) -> (i32, i32) {
    %c0_i32 = arith.constant 0 : i32
    %c0_i32_0 = arith.constant 0 : i32
    %c0_i32_1 = arith.constant 0 : i32
    return %c0_i32, %c0_i32_0 : i32, i32
  }
  func.func @transform_11(%arg0: i32) -> (i32, i32) {
    %c0_i32 = arith.constant 0 : i32
    %c0_i32_0 = arith.constant 0 : i32
    %c0_i32_1 = arith.constant 0 : i32
    return %c0_i32, %c0_i32_0 : i32, i32
  }
  func.func @transform_12(%arg0: i32) -> (i32, i32) {
    %c0_i32 = arith.constant 0 : i32
    %c0_i32_0 = arith.constant 0 : i32
    %c0_i32_1 = arith.constant 0 : i32
    return %c0_i32, %c0_i32_0 : i32, i32
  }
  func.func @transform_13(%arg0: i32) -> (i32, i32) {
    %c0_i32 = arith.constant 0 : i32
    %c0_i32_0 = arith.constant 0 : i32
    %c0_i32_1 = arith.constant 0 : i32
    return %c0_i32, %c0_i32_0 : i32, i32
  }
}

</mosaic_0001>

<llo_original>
// kernel: tpu_custom_call.1
$region0: #{tpu_custom_call.1}
  #allocation0 [shape = 'u32[]', space=smem, size = 0x4, offset = 0x4, fixed_abs, tag = 'smem constant byte address 0x4 - core index']
  #allocation1 [shape = 'u32[144,128]{1,0:T(1,128)}', space=vmem, size = 0x12000, scoped, tag = 'internal scratch']
  %s0 = inlined_call_operand.vmem [shape: f32[768,1], index: 0, kind: input, shape index: {}]
  %s1 = inlined_call_operand.vmem [shape: s32[768,1], index: 1, kind: input, shape index: {}]
  %s2 = inlined_call_operand.vmem [shape: s32[1,768], index: 2, kind: input, shape index: {}]
  %s3 = inlined_call_operand.vmem [shape: f32[48,4], index: 3, kind: input, shape index: {}]
  %s4 = inlined_call_operand.vmem [shape: f32[48,1], index: 4, kind: input, shape index: {}]
  %s5 = inlined_call_operand.vmem [shape: f32[1,64], index: 5, kind: input, shape index: {}]
  %s6 = inlined_call_operand.vmem [shape: f32[1,64], index: 6, kind: input, shape index: {}]
  %s7 = inlined_call_operand.vmem [shape: bf16[64,128], index: 7, kind: input, shape index: {}]
  %s8 = inlined_call_operand.vmem [shape: f32[1,128], index: 8, kind: input, shape index: {}]
  %s9 = inlined_call_operand.vmem [shape: bf16[4,128], index: 9, kind: input, shape index: {}]
  %s10 = inlined_call_operand.vmem [shape: bf16[128,32], index: 10, kind: input, shape index: {}]
  %s11 = inlined_call_operand.vmem [shape: f32[4,32], index: 11, kind: input, shape index: {}]
  %s12 = inlined_call_operand.vmem [shape: f32[1,32], index: 12, kind: input, shape index: {}]
  %s13 = inlined_call_operand.vmem [shape: f32[48,32], index: 13, kind: output, shape index: {}]
  %s14 = sld [smem:[#allocation0]]
  $region93: #{tpu_custom_call.1} parent=0
    _
  %s16 = ssub.s32 1, %s14
  %s17 = scalar_select 0, %s16, %s14
  loop: start=0, step=1, limit=5
  $region2: #{tpu_custom_call.1} parent=0 // loop_pre_header
    _
  $region3: #{tpu_custom_call.1} parent=0 // loop_header
    %s19 = sphi 0, %s23
    %p20 = scmp.ge.s32.totalorder %s19, 5
    %s29 = sphi 0, %s31
    %s32 = sphi 0, %s29
    %s33 = sphi 0, %s32
    %s49 = sphi 0, %s33
    %s55 = sphi 0, %s57
    %s58 = sphi 0, %s55
    %s59 = sphi 0, %s58
    %s75 = sphi 0, %s59
    %s81 = sphi 0, %s83
    %s84 = sphi 0, %s81
    %s85 = sphi 0, %s84
    %s101 = sphi 0, %s85
    %s105 = sphi 0, %s105
    %s107 = sphi 0, %s105
    %s108 = sphi 0, %s107
    %s122 = sphi 0, %s108
    %s126 = sphi 0, %s126
    %s128 = sphi 0, %s126
    %s129 = sphi 0, %s128
    %s143 = sphi 0, %s129
    %s147 = sphi 0, %s147
    %s149 = sphi 0, %s147
    %s150 = sphi 0, %s149
    %s164 = sphi 0, %s150
    %s168 = sphi 0, %s168
    %s170 = sphi 0, %s168
    %s171 = sphi 0, %s170
    %s185 = sphi 0, %s171
    %s189 = sphi 0, %s189
    %s191 = sphi 0, %s189
    %s192 = sphi 0, %s191
    %s206 = sphi 0, %s192
    %s210 = sphi 0, %s210
    %s212 = sphi 0, %s210
    %s213 = sphi 0, %s212
    %s227 = sphi 0, %s213
    %s231 = sphi 0, %s231
    %s233 = sphi 0, %s231
    %s234 = sphi 0, %s233
    %s248 = sphi 0, %s234
    %s252 = sphi 0, %s252
    %s254 = sphi 0, %s252
    %s255 = sphi 0, %s254
    %s269 = sphi 0, %s255
    %s273 = sphi 0, %s273
    %s275 = sphi 0, %s273
    %s276 = sphi 0, %s275
    %s290 = sphi 0, %s276
    %s294 = sphi 0, %s294
    %s296 = sphi 0, %s294
    %s297 = sphi 0, %s296
    %s311 = sphi 0, %s297
    %s315 = sphi 0, %s315
    %s317 = sphi 0, %s315
    %s318 = sphi 0, %s317
    %s332 = sphi 0, %s318
  $region4: #{tpu_custom_call.1} parent=0 // loop_header_branch
    %22 = sbr.rel (%p20) target = $region8
  $region5: #{tpu_custom_call.1} parent=0 // loop_body
    %s24 = ssub.s32 %s19, 1
    %s25 = ssub.s32 %s19, 2
    %s26 = sadd.s32 %s19, 1
    %s27 = ssub.s32 %s19, %s26
    %p28 = scmp.eq.s32.totalorder %s27, 0
    %s30 = sadd.s32 %s29, 1
    %s31 = scalar_select %p28, %s29, %s30
    %p34 = pneg %p28
    %p35 = scmp.eq.s32.totalorder %s19, 2
    %p36 = por %p34, %p35
    %p37 = scmp.ne.s32.totalorder %s29, %s32
    %p38 = scmp.eq.s32.totalorder %s19, 0
    %p39 = por %p37, %p38
    %p40 = scmp.ne.s32.totalorder %s29, %s32
    %p41 = scmp.eq.s32.totalorder %s24, 2
    %p42 = por %p40, %p41
    %p43 = scmp.ne.s32.totalorder %s32, %s33
    %p44 = scmp.eq.s32.totalorder %s24, 0
    %p45 = por %p43, %p44
    %p46 = scmp.ne.s32.totalorder %s32, %s33
    %p47 = scmp.eq.s32.totalorder %s25, 2
    %p48 = por %p46, %p47
    %p50 = scmp.ne.s32.totalorder %s33, %s49
    %p51 = scmp.eq.s32.totalorder %s25, 0
    %p52 = por %p50, %p51
    %s53 = ssub.s32 %s19, %s26
    %p54 = scmp.eq.s32.totalorder %s53, 0
    %s56 = sadd.s32 %s55, 1
    %s57 = scalar_select %p54, %s55, %s56
    %p60 = pneg %p54
    %p61 = scmp.eq.s32.totalorder %s19, 2
    %p62 = por %p60, %p61
    %p63 = scmp.ne.s32.totalorder %s55, %s58
    %p64 = scmp.eq.s32.totalorder %s19, 0
    %p65 = por %p63, %p64
    %p66 = scmp.ne.s32.totalorder %s55, %s58
    %p67 = scmp.eq.s32.totalorder %s24, 2
    %p68 = por %p66, %p67
    %p69 = scmp.ne.s32.totalorder %s58, %s59
    %p70 = scmp.eq.s32.totalorder %s24, 0
    %p71 = por %p69, %p70
    %p72 = scmp.ne.s32.totalorder %s58, %s59
    %p73 = scmp.eq.s32.totalorder %s25, 2
    %p74 = por %p72, %p73
    %p76 = scmp.ne.s32.totalorder %s59, %s75
    %p77 = scmp.eq.s32.totalorder %s25, 0
    %p78 = por %p76, %p77
    %s79 = ssub.s32 %s19, %s26
    %p80 = scmp.eq.s32.totalorder %s79, 0
    %s82 = sadd.s32 %s81, 1
    %s83 = scalar_select %p80, %s81, %s82
    %p86 = pneg %p80
    %p87 = scmp.eq.s32.totalorder %s19, 2
    %p88 = por %p86, %p87
    %p89 = scmp.ne.s32.totalorder %s81, %s84
    %p90 = scmp.eq.s32.totalorder %s19, 0
    %p91 = por %p89, %p90
    %p92 = scmp.ne.s32.totalorder %s81, %s84
    %p93 = scmp.eq.s32.totalorder %s24, 2
    %p94 = por %p92, %p93
    %p95 = scmp.ne.s32.totalorder %s84, %s85
    %p96 = scmp.eq.s32.totalorder %s24, 0
    %p97 = por %p95, %p96
    %p98 = scmp.ne.s32.totalorder %s84, %s85
    %p99 = scmp.eq.s32.totalorder %s25, 2
    %p100 = por %p98, %p99
    %p102 = scmp.ne.s32.totalorder %s85, %s101
    %p103 = scmp.eq.s32.totalorder %s25, 0
    %p104 = por %p102, %p103
    %s106 = sadd.s32 %s105, 1
    %p109 = scmp.eq.s32.totalorder %s19, 2
    %p110 = scmp.ne.s32.totalorder %s105, %s107
    %p111 = scmp.eq.s32.totalorder %s19, 0
    %p112 = por %p110, %p111
    %p113 = scmp.ne.s32.totalorder %s105, %s107
    %p114 = scmp.eq.s32.totalorder %s24, 2
    %p115 = por %p113, %p114
    %p116 = scmp.ne.s32.totalorder %s107, %s108
    %p117 = scmp.eq.s32.totalorder %s24, 0
    %p118 = por %p116, %p117
    %p119 = scmp.ne.s32.totalorder %s107, %s108
    %p120 = scmp.eq.s32.totalorder %s25, 2
    %p121 = por %p119, %p120
    %p123 = scmp.ne.s32.totalorder %s108, %s122
    %p124 = scmp.eq.s32.totalorder %s25, 0
    %p125 = por %p123, %p124
    %s127 = sadd.s32 %s126, 1
    %p130 = scmp.eq.s32.totalorder %s19, 2
    %p131 = scmp.ne.s32.totalorder %s126, %s128
    %p132 = scmp.eq.s32.totalorder %s19, 0
    %p133 = por %p131, %p132
    %p134 = scmp.ne.s32.totalorder %s126, %s128
    %p135 = scmp.eq.s32.totalorder %s24, 2
    %p136 = por %p134, %p135
    %p137 = scmp.ne.s32.totalorder %s128, %s129
    %p138 = scmp.eq.s32.totalorder %s24, 0
    %p139 = por %p137, %p138
    %p140 = scmp.ne.s32.totalorder %s128, %s129
    %p141 = scmp.eq.s32.totalorder %s25, 2
    %p142 = por %p140, %p141
    %p144 = scmp.ne.s32.totalorder %s129, %s143
    %p145 = scmp.eq.s32.totalorder %s25, 0
    %p146 = por %p144, %p145
    %s148 = sadd.s32 %s147, 1
    %p151 = scmp.eq.s32.totalorder %s19, 2
    %p152 = scmp.ne.s32.totalorder %s147, %s149
    %p153 = scmp.eq.s32.totalorder %s19, 0
    %p154 = por %p152, %p153
    %p155 = scmp.ne.s32.totalorder %s147, %s149
    %p156 = scmp.eq.s32.totalorder %s24, 2
    %p157 = por %p155, %p156
    %p158 = scmp.ne.s32.totalorder %s149, %s150
    %p159 = scmp.eq.s32.totalorder %s24, 0
    %p160 = por %p158, %p159
    %p161 = scmp.ne.s32.totalorder %s149, %s150
    %p162 = scmp.eq.s32.totalorder %s25, 2
    %p163 = por %p161, %p162
    %p165 = scmp.ne.s32.totalorder %s150, %s164
    %p166 = scmp.eq.s32.totalorder %s25, 0
    %p167 = por %p165, %p166
    %s169 = sadd.s32 %s168, 1
    %p172 = scmp.eq.s32.totalorder %s19, 2
    %p173 = scmp.ne.s32.totalorder %s168, %s170
    %p174 = scmp.eq.s32.totalorder %s19, 0
    %p175 = por %p173, %p174
    %p176 = scmp.ne.s32.totalorder %s168, %s170
    %p177 = scmp.eq.s32.totalorder %s24, 2
    %p178 = por %p176, %p177
    %p179 = scmp.ne.s32.totalorder %s170, %s171
    %p180 = scmp.eq.s32.totalorder %s24, 0
    %p181 = por %p179, %p180
    %p182 = scmp.ne.s32.totalorder %s170, %s171
    %p183 = scmp.eq.s32.totalorder %s25, 2
    %p184 = por %p182, %p183
    %p186 = scmp.ne.s32.totalorder %s171, %s185
    %p187 = scmp.eq.s32.totalorder %s25, 0
    %p188 = por %p186, %p187
    %s190 = sadd.s32 %s189, 1
    %p193 = scmp.eq.s32.totalorder %s19, 2
    %p194 = scmp.ne.s32.totalorder %s189, %s191
    %p195 = scmp.eq.s32.totalorder %s19, 0
    %p196 = por %p194, %p195
    %p197 = scmp.ne.s32.totalorder %s189, %s191
    %p198 = scmp.eq.s32.totalorder %s24, 2
    %p199 = por %p197, %p198
    %p200 = scmp.ne.s32.totalorder %s191, %s192
    %p201 = scmp.eq.s32.totalorder %s24, 0
    %p202 = por %p200, %p201
    %p203 = scmp.ne.s32.totalorder %s191, %s192
    %p204 = scmp.eq.s32.totalorder %s25, 2
    %p205 = por %p203, %p204
    %p207 = scmp.ne.s32.totalorder %s192, %s206
    %p208 = scmp.eq.s32.totalorder %s25, 0
    %p209 = por %p207, %p208
    %s211 = sadd.s32 %s210, 1
    %p214 = scmp.eq.s32.totalorder %s19, 2
    %p215 = scmp.ne.s32.totalorder %s210, %s212
    %p216 = scmp.eq.s32.totalorder %s19, 0
    %p217 = por %p215, %p216
    %p218 = scmp.ne.s32.totalorder %s210, %s212
    %p219 = scmp.eq.s32.totalorder %s24, 2
    %p220 = por %p218, %p219
    %p221 = scmp.ne.s32.totalorder %s212, %s213
    %p222 = scmp.eq.s32.totalorder %s24, 0
    %p223 = por %p221, %p222
    %p224 = scmp.ne.s32.totalorder %s212, %s213
    %p225 = scmp.eq.s32.totalorder %s25, 2
    %p226 = por %p224, %p225
    %p228 = scmp.ne.s32.totalorder %s213, %s227
    %p229 = scmp.eq.s32.totalorder %s25, 0
    %p230 = por %p228, %p229
    %s232 = sadd.s32 %s231, 1
    %p235 = scmp.eq.s32.totalorder %s19, 2
    %p236 = scmp.ne.s32.totalorder %s231, %s233
    %p237 = scmp.eq.s32.totalorder %s19, 0
    %p238 = por %p236, %p237
    %p239 = scmp.ne.s32.totalorder %s231, %s233
    %p240 = scmp.eq.s32.totalorder %s24, 2
    %p241 = por %p239, %p240
    %p242 = scmp.ne.s32.totalorder %s233, %s234
    %p243 = scmp.eq.s32.totalorder %s24, 0
    %p244 = por %p242, %p243
    %p245 = scmp.ne.s32.totalorder %s233, %s234
    %p246 = scmp.eq.s32.totalorder %s25, 2
    %p247 = por %p245, %p246
    %p249 = scmp.ne.s32.totalorder %s234, %s248
    %p250 = scmp.eq.s32.totalorder %s25, 0
    %p251 = por %p249, %p250
    %s253 = sadd.s32 %s252, 1
    %p256 = scmp.eq.s32.totalorder %s19, 2
    %p257 = scmp.ne.s32.totalorder %s252, %s254
    %p258 = scmp.eq.s32.totalorder %s19, 0
    %p259 = por %p257, %p258
    %p260 = scmp.ne.s32.totalorder %s252, %s254
    %p261 = scmp.eq.s32.totalorder %s24, 2
    %p262 = por %p260, %p261
    %p263 = scmp.ne.s32.totalorder %s254, %s255
    %p264 = scmp.eq.s32.totalorder %s24, 0
    %p265 = por %p263, %p264
    %p266 = scmp.ne.s32.totalorder %s254, %s255
    %p267 = scmp.eq.s32.totalorder %s25, 2
    %p268 = por %p266, %p267
    %p270 = scmp.ne.s32.totalorder %s255, %s269
    %p271 = scmp.eq.s32.totalorder %s25, 0
    %p272 = por %p270, %p271
    %s274 = sadd.s32 %s273, 1
    %p277 = scmp.eq.s32.totalorder %s19, 2
    %p278 = scmp.ne.s32.totalorder %s273, %s275
    %p279 = scmp.eq.s32.totalorder %s19, 0
    %p280 = por %p278, %p279
    %p281 = scmp.ne.s32.totalorder %s273, %s275
    %p282 = scmp.eq.s32.totalorder %s24, 2
    %p283 = por %p281, %p282
    %p284 = scmp.ne.s32.totalorder %s275, %s276
    %p285 = scmp.eq.s32.totalorder %s24, 0
    %p286 = por %p284, %p285
    %p287 = scmp.ne.s32.totalorder %s275, %s276
    %p288 = scmp.eq.s32.totalorder %s25, 2
    %p289 = por %p287, %p288
    %p291 = scmp.ne.s32.totalorder %s276, %s290
    %p292 = scmp.eq.s32.totalorder %s25, 0
    %p293 = por %p291, %p292
    %s295 = sadd.s32 %s294, 1
    %p298 = scmp.eq.s32.totalorder %s19, 2
    %p299 = scmp.ne.s32.totalorder %s294, %s296
    %p300 = scmp.eq.s32.totalorder %s19, 0
    %p301 = por %p299, %p300
    %p302 = scmp.ne.s32.totalorder %s294, %s296
    %p303 = scmp.eq.s32.totalorder %s24, 2
    %p304 = por %p302, %p303
    %p305 = scmp.ne.s32.totalorder %s296, %s297
    %p306 = scmp.eq.s32.totalorder %s24, 0
    %p307 = por %p305, %p306
    %p308 = scmp.ne.s32.totalorder %s296, %s297
    %p309 = scmp.eq.s32.totalorder %s25, 2
    %p310 = por %p308, %p309
    %p312 = scmp.ne.s32.totalorder %s297, %s311
    %p313 = scmp.eq.s32.totalorder %s25, 0
    %p314 = por %p312, %p313
    %s316 = sadd.s32 %s315, 1
    %p319 = scmp.eq.s32.totalorder %s19, 2
    %p320 = scmp.ne.s32.totalorder %s315, %s317
    %p321 = scmp.eq.s32.totalorder %s19, 0
    %p322 = por %p320, %p321
    %p323 = scmp.ne.s32.totalorder %s315, %s317
    %p324 = scmp.eq.s32.totalorder %s24, 2
    %p325 = por %p323, %p324
    %p326 = scmp.ne.s32.totalorder %s317, %s318
    %p327 = scmp.eq.s32.totalorder %s24, 0
    %p328 = por %p326, %p327
    %p329 = scmp.ne.s32.totalorder %s317, %s318
    %p330 = scmp.eq.s32.totalorder %s25, 2
    %p331 = por %p329, %p330
    %p333 = scmp.ne.s32.totalorder %s318, %s332
    %p334 = scmp.eq.s32.totalorder %s25, 0
    %p335 = por %p333, %p334
    %p336 = scmp.le.s32.totalorder 1, %s19
    %p337 = scmp.lt.s32.totalorder %s19, 4
    %p338 = pnand %p336, %p337
    %p339 = pneg %p338
    // Predicated region
    $region9: #{tpu_custom_call.1} parent=5 // pred_check
      _
    $region10: #{tpu_custom_call.1} parent=5 // pred_check_branch
      %341 = sbr.rel (%p338) target = $region12
    $region11: #{tpu_custom_call.1} parent=5 // pred_region
      %s342 = ssub.s32 %s19, 1
      // Predicated region
      $region13: #{tpu_custom_call.1} parent=11 // pred_check
        %p343 = pneg %p118
      $region14: #{tpu_custom_call.1} parent=11 // pred_check_branch
        %345 = sbr.rel (%p343) target = $region16
      $region15: #{tpu_custom_call.1} parent=11 // pred_region
        _
      $region16: #{tpu_custom_call.1} parent=11 // pred_fallthru
        _
      // Predicated region
      $region17: #{tpu_custom_call.1} parent=11 // pred_check
        %p346 = pneg %p139
      $region18: #{tpu_custom_call.1} parent=11 // pred_check_branch
        %348 = sbr.rel (%p346) target = $region20
      $region19: #{tpu_custom_call.1} parent=11 // pred_region
        _
      $region20: #{tpu_custom_call.1} parent=11 // pred_fallthru
        _
      // Predicated region
      $region21: #{tpu_custom_call.1} parent=11 // pred_check
        %p349 = pneg %p160
      $region22: #{tpu_custom_call.1} parent=11 // pred_check_branch
        %351 = sbr.rel (%p349) target = $region24
      $region23: #{tpu_custom_call.1} parent=11 // pred_region
        _
      $region24: #{tpu_custom_call.1} parent=11 // pred_fallthru
        _
      // Predicated region
      $region25: #{tpu_custom_call.1} parent=11 // pred_check
        %p352 = pneg %p181
      $region26: #{tpu_custom_call.1} parent=11 // pred_check_branch
        %354 = sbr.rel (%p352) target = $region28
      $region27: #{tpu_custom_call.1} parent=11 // pred_region
        _
      $region28: #{tpu_custom_call.1} parent=11 // pred_fallthru
        _
      // Predicated region
      $region29: #{tpu_custom_call.1} parent=11 // pred_check
        %p355 = pneg %p202
      $region30: #{tpu_custom_call.1} parent=11 // pred_check_branch
        %357 = sbr.rel (%p355) target = $region32
      $region31: #{tpu_custom_call.1} parent=11 // pred_region
        _
      $region32: #{tpu_custom_call.1} parent=11 // pred_fallthru
        _
      // Predicated region
      $region33: #{tpu_custom_call.1} parent=11 // pred_check
        %p358 = pneg %p223
      $region34: #{tpu_custom_call.1} parent=11 // pred_check_branch
        %360 = sbr.rel (%p358) target = $region36
      $region35: #{tpu_custom_call.1} parent=11 // pred_region
        _
      $region36: #{tpu_custom_call.1} parent=11 // pred_fallthru
        _
      // Predicated region
      $region37: #{tpu_custom_call.1} parent=11 // pred_check
        %p361 = pneg %p244
      $region38: #{tpu_custom_call.1} parent=11 // pred_check_branch
        %363 = sbr.rel (%p361) target = $region40
      $region39: #{tpu_custom_call.1} parent=11 // pred_region
        _
      $region40: #{tpu_custom_call.1} parent=11 // pred_fallthru
        _
      // Predicated region
      $region41: #{tpu_custom_call.1} parent=11 // pred_check
        %p364 = pneg %p265
      $region42: #{tpu_custom_call.1} parent=11 // pred_check_branch
        %366 = sbr.rel (%p364) target = $region44
      $region43: #{tpu_custom_call.1} parent=11 // pred_region
        _
      $region44: #{tpu_custom_call.1} parent=11 // pred_fallthru
        _
      // Predicated region
      $region45: #{tpu_custom_call.1} parent=11 // pred_check
        %p367 = pneg %p286
      $region46: #{tpu_custom_call.1} parent=11 // pred_check_branch
        %369 = sbr.rel (%p367) target = $region48
      $region47: #{tpu_custom_call.1} parent=11 // pred_region
        _
      $region48: #{tpu_custom_call.1} parent=11 // pred_fallthru
        _
      // Predicated region
      $region49: #{tpu_custom_call.1} parent=11 // pred_check
        %p370 = pneg %p307
      $region50: #{tpu_custom_call.1} parent=11 // pred_check_branch
        %372 = sbr.rel (%p370) target = $region52
      $region51: #{tpu_custom_call.1} parent=11 // pred_region
        _
      $region52: #{tpu_custom_call.1} parent=11 // pred_fallthru
        _
    $region12: #{tpu_custom_call.1} parent=5 // pred_fallthru
      _
    %p373 = scmp.lt.s32.totalorder %s19, 3
    // Predicated region
    $region53: #{tpu_custom_call.1} parent=5 // pred_check
      %p374 = pneg %p373
    $region54: #{tpu_custom_call.1} parent=5 // pred_check_branch
      %376 = sbr.rel (%p374) target = $region56
    $region55: #{tpu_custom_call.1} parent=5 // pred_region
      // Predicated region
      $region57: #{tpu_custom_call.1} parent=55 // pred_check
        %p377 = pneg %p39
      $region58: #{tpu_custom_call.1} parent=55 // pred_check_branch
        %379 = sbr.rel (%p377) target = $region60
      $region59: #{tpu_custom_call.1} parent=55 // pred_region
        %s380 = smul.u32 32, %s19
        %p381 = scmp.lt.s32.totalorder %s380, 95
        %s382 = scalar_select %p381, %s380, 95
        %s383 = smul.addr %s382, 8
        %s384 = scalar_lea.vmem %s0, %s383
        %s385 = smul.u32 32, %s19
      $region60: #{tpu_custom_call.1} parent=55 // pred_fallthru
        _
      // Predicated region
      $region61: #{tpu_custom_call.1} parent=55 // pred_check
        %p386 = pneg %p65
      $region62: #{tpu_custom_call.1} parent=55 // pred_check_branch
        %388 = sbr.rel (%p386) target = $region64
      $region63: #{tpu_custom_call.1} parent=55 // pred_region
        %s389 = smul.u32 32, %s19
        %p390 = scmp.lt.s32.totalorder %s389, 95
        %s391 = scalar_select %p390, %s389, 95
        %s392 = smul.addr %s391, 8
        %s393 = scalar_lea.vmem %s1, %s392
        %s394 = smul.u32 32, %s19
      $region64: #{tpu_custom_call.1} parent=55 // pred_fallthru
        _
      // Predicated region
      $region65: #{tpu_custom_call.1} parent=55 // pred_check
        %p395 = pneg %p91
      $region66: #{tpu_custom_call.1} parent=55 // pred_check_branch
        %397 = sbr.rel (%p395) target = $region68
      $region67: #{tpu_custom_call.1} parent=55 // pred_region
        %s398 = smul.u32 2, %s19
        %p399 = scmp.lt.s32.totalorder %s398, 5
        %s400 = scalar_select %p399, %s398, 5
        %s401 = scalar_lea.vmem %s2, %s400
        %s402 = smul.u32 2, %s19
      $region68: #{tpu_custom_call.1} parent=55 // pred_fallthru
        _
    $region56: #{tpu_custom_call.1} parent=5 // pred_fallthru
      _
    %p403 = scmp.le.s32.totalorder 1, %s19
    %p404 = scmp.lt.s32.totalorder %s19, 4
    %p405 = pnand %p403, %p404
    %p406 = pneg %p405
    // Predicated region
    $region69: #{tpu_custom_call.1} parent=5 // pred_check
      _
    $region70: #{tpu_custom_call.1} parent=5 // pred_check_branch
      %408 = sbr.rel (%p405) target = $region72
    $region71: #{tpu_custom_call.1} parent=5 // pred_region
      %s409 = ssub.s32 %s19, 1
      %s410 = smul.u32 32, %s24
      %p411 = scmp.lt.s32.totalorder %s410, 95
      %s412 = scalar_select %p411, %s410, 95
      %s413 = smul.addr %s412, 8
      %s414 = scalar_lea.vmem %s0, %s413
      %p415 = pneg %p45
      %p416 = pneg %p42
      %s417 = smul.u32 32, %s24
      %p418 = scmp.lt.s32.totalorder %s417, 95
      %s419 = scalar_select %p418, %s417, 95
      %s420 = smul.addr %s419, 8
      %s421 = scalar_lea.vmem %s1, %s420
      %p422 = pneg %p71
      %p423 = pneg %p68
      %s424 = smul.u32 2, %s24
      %p425 = scmp.lt.s32.totalorder %s424, 5
      %s426 = scalar_select %p425, %s424, 5
      %s427 = scalar_lea.vmem %s2, %s426
      %p428 = pneg %p97
      %p429 = pneg %p94
      %p430 = pneg %p118
      %p431 = pneg %p115
      %p432 = pneg %p139
      %p433 = pneg %p136
      %p434 = pneg %p160
      %p435 = pneg %p157
      %p436 = pneg %p181
      %p437 = pneg %p178
      %p438 = pneg %p202
      %p439 = pneg %p199
      %p440 = pneg %p223
      %p441 = pneg %p220
      %p442 = pneg %p244
      %p443 = pneg %p241
      %p444 = pneg %p265
      %p445 = pneg %p262
      %p446 = pneg %p286
      %p447 = pneg %p283
      %p448 = pneg %p307
      %p449 = pneg %p304
      %p450 = pneg %p328
      %p451 = pneg %p325
      %s452 = smul.u32 32, %s24
      %p453 = scmp.lt.s32.totalorder %s452, 95
      %s454 = scalar_select %p453, %s452, 95
      %s455 = smul.addr %s454, 8
      %s456 = scalar_lea.vmem %s0, %s455
      %s457 = smul.u32 32, %s24
      %s458 = smul.u32 32, %s24
      %p459 = scmp.lt.s32.totalorder %s458, 95
      %s460 = scalar_select %p459, %s458, 95
      %s461 = smul.addr %s460, 8
      %s462 = scalar_lea.vmem %s1, %s461
      %s463 = smul.u32 32, %s24
      %s464 = smul.u32 2, %s24
      %p465 = scmp.lt.s32.totalorder %s464, 5
      %s466 = scalar_select %p465, %s464, 5
      %s467 = scalar_lea.vmem %s2, %s466
      %s468 = smul.u32 2, %s24
      %p470 = scmp.eq.s32.totalorder %s24, 0
      // Predicated region
      $region73: #{tpu_custom_call.1} parent=71 // pred_check
        %p471 = pneg %p470
      $region74: #{tpu_custom_call.1} parent=71 // pred_check_branch
        %473 = sbr.rel (%p471) target = $region76
      $region75: #{tpu_custom_call.1} parent=71 // pred_region
        %vm474 = vcmask 261120
        %475 = vst.msk [vmem:[%s13] sm:$0xff] %vm474, 0.0
        %476 = vst.msk [vmem:[%s13 + $0x8] sm:$0xff] %vm474, 0.0
        %477 = vst.msk [vmem:[%s13 + $0x10] sm:$0xff] %vm474, 0.0
        %478 = vst.msk [vmem:[%s13 + $0x18] sm:$0xff] %vm474, 0.0
        %479 = vst.msk [vmem:[%s13 + $0x20] sm:$0xff] %vm474, 0.0
        %480 = vst.msk [vmem:[%s13 + $0x28] sm:$0xff] %vm474, 0.0
      $region76: #{tpu_custom_call.1} parent=71 // pred_fallthru
        _
      %v481 = vld [vmem:[%s456] sm:$0xff]
      %v482 = vld [vmem:[%s456 + $0x8] sm:$0xff]
      %v483 = vld [vmem:[%s456 + $0x10] sm:$0xff]
      %v484 = vld [vmem:[%s456 + $0x18] sm:$0xff]
      %v485 = vld [vmem:[%s456 + $0x20] sm:$0xff]
      %v486 = vld [vmem:[%s456 + $0x28] sm:$0xff]
      %v487 = vld [vmem:[%s456 + $0x30] sm:$0xff]
      %v488 = vld [vmem:[%s456 + $0x38] sm:$0xff]
      %v489 = vld [vmem:[%s456 + $0x40] sm:$0xff]
      %v490 = vld [vmem:[%s456 + $0x48] sm:$0xff]
      %v491 = vld [vmem:[%s456 + $0x50] sm:$0xff]
      %v492 = vld [vmem:[%s456 + $0x58] sm:$0xff]
      %v493 = vld [vmem:[%s456 + $0x60] sm:$0xff]
      %v494 = vld [vmem:[%s456 + $0x68] sm:$0xff]
      %v495 = vld [vmem:[%s456 + $0x70] sm:$0xff]
      %v496 = vld [vmem:[%s456 + $0x78] sm:$0xff]
      %v497 = vld [vmem:[%s456 + $0x80] sm:$0xff]
      %v498 = vld [vmem:[%s456 + $0x88] sm:$0xff]
      %v499 = vld [vmem:[%s456 + $0x90] sm:$0xff]
      %v500 = vld [vmem:[%s456 + $0x98] sm:$0xff]
      %v501 = vld [vmem:[%s456 + $0xa0] sm:$0xff]
      %v502 = vld [vmem:[%s456 + $0xa8] sm:$0xff]
      %v503 = vld [vmem:[%s456 + $0xb0] sm:$0xff]
      %v504 = vld [vmem:[%s456 + $0xb8] sm:$0xff]
      %v505 = vld [vmem:[%s456 + $0xc0] sm:$0xff]
      %v506 = vld [vmem:[%s456 + $0xc8] sm:$0xff]
      %v507 = vld [vmem:[%s456 + $0xd0] sm:$0xff]
      %v508 = vld [vmem:[%s456 + $0xd8] sm:$0xff]
      %v509 = vld [vmem:[%s456 + $0xe0] sm:$0xff]
      %v510 = vld [vmem:[%s456 + $0xe8] sm:$0xff]
      %v511 = vld [vmem:[%s456 + $0xf0] sm:$0xff]
      %v512 = vld [vmem:[%s456 + $0xf8] sm:$0xff]
      %v513 = vld [vmem:[%s5] sm:$0x1]
      %515 = vset.pattern.permute.xlu0 0
      %516 = vperm.xlu0 %515, %v481
      %v517 = vpop.permute.xlu0 %516
      %520 = vset.pattern.permute.xlu0 0
      %521 = vperm.xlu0 %520, %v482
      %v522 = vpop.permute.xlu0 %521
      %525 = vset.pattern.permute.xlu0 0
      %526 = vperm.xlu0 %525, %v483
      %v527 = vpop.permute.xlu0 %526
      %530 = vset.pattern.permute.xlu0 0
      %531 = vperm.xlu0 %530, %v484
      %v532 = vpop.permute.xlu0 %531
      %535 = vset.pattern.permute.xlu0 0
      %536 = vperm.xlu0 %535, %v485
      %v537 = vpop.permute.xlu0 %536
      %540 = vset.pattern.permute.xlu0 0
      %541 = vperm.xlu0 %540, %v486
      %v542 = vpop.permute.xlu0 %541
      %545 = vset.pattern.permute.xlu0 0
      %546 = vperm.xlu0 %545, %v487
      %v547 = vpop.permute.xlu0 %546
      %550 = vset.pattern.permute.xlu0 0
      %551 = vperm.xlu0 %550, %v488
      %v552 = vpop.permute.xlu0 %551
      %555 = vset.pattern.permute.xlu0 0
      %556 = vperm.xlu0 %555, %v489
      %v557 = vpop.permute.xlu0 %556
      %560 = vset.pattern.permute.xlu0 0
      %561 = vperm.xlu0 %560, %v490
      %v562 = vpop.permute.xlu0 %561
      %565 = vset.pattern.permute.xlu0 0
      %566 = vperm.xlu0 %565, %v491
      %v567 = vpop.permute.xlu0 %566
      %570 = vset.pattern.permute.xlu0 0
      %571 = vperm.xlu0 %570, %v492
      %v572 = vpop.permute.xlu0 %571
      %575 = vset.pattern.permute.xlu0 0
      %576 = vperm.xlu0 %575, %v493
      %v577 = vpop.permute.xlu0 %576
      %580 = vset.pattern.permute.xlu0 0
      %581 = vperm.xlu0 %580, %v494
      %v582 = vpop.permute.xlu0 %581
      %585 = vset.pattern.permute.xlu0 0
      %586 = vperm.xlu0 %585, %v495
      %v587 = vpop.permute.xlu0 %586
      %590 = vset.pattern.permute.xlu0 0
      %591 = vperm.xlu0 %590, %v496
      %v592 = vpop.permute.xlu0 %591
      %595 = vset.pattern.permute.xlu0 0
      %596 = vperm.xlu0 %595, %v497
      %v597 = vpop.permute.xlu0 %596
      %600 = vset.pattern.permute.xlu0 0
      %601 = vperm.xlu0 %600, %v498
      %v602 = vpop.permute.xlu0 %601
      %605 = vset.pattern.permute.xlu0 0
      %606 = vperm.xlu0 %605, %v499
      %v607 = vpop.permute.xlu0 %606
      %610 = vset.pattern.permute.xlu0 0
      %611 = vperm.xlu0 %610, %v500
      %v612 = vpop.permute.xlu0 %611
      %615 = vset.pattern.permute.xlu0 0
      %616 = vperm.xlu0 %615, %v501
      %v617 = vpop.permute.xlu0 %616
      %620 = vset.pattern.permute.xlu0 0
      %621 = vperm.xlu0 %620, %v502
      %v622 = vpop.permute.xlu0 %621
      %625 = vset.pattern.permute.xlu0 0
      %626 = vperm.xlu0 %625, %v503
      %v627 = vpop.permute.xlu0 %626
      %630 = vset.pattern.permute.xlu0 0
      %631 = vperm.xlu0 %630, %v504
      %v632 = vpop.permute.xlu0 %631
      %635 = vset.pattern.permute.xlu0 0
      %636 = vperm.xlu0 %635, %v505
      %v637 = vpop.permute.xlu0 %636
      %640 = vset.pattern.permute.xlu0 0
      %641 = vperm.xlu0 %640, %v506
      %v642 = vpop.permute.xlu0 %641
      %645 = vset.pattern.permute.xlu0 0
      %646 = vperm.xlu0 %645, %v507
      %v647 = vpop.permute.xlu0 %646
      %650 = vset.pattern.permute.xlu0 0
      %651 = vperm.xlu0 %650, %v508
      %v652 = vpop.permute.xlu0 %651
      %655 = vset.pattern.permute.xlu0 0
      %656 = vperm.xlu0 %655, %v509
      %v657 = vpop.permute.xlu0 %656
      %660 = vset.pattern.permute.xlu0 0
      %661 = vperm.xlu0 %660, %v510
      %v662 = vpop.permute.xlu0 %661
      %665 = vset.pattern.permute.xlu0 0
      %666 = vperm.xlu0 %665, %v511
      %v667 = vpop.permute.xlu0 %666
      %670 = vset.pattern.permute.xlu0 0
      %671 = vperm.xlu0 %670, %v512
      %v672 = vpop.permute.xlu0 %671
      %v675 = vlaneseq
      %v676 = vshrl.u32 %v675, 7
      %v677 = vsub.s32 0, %v676
      %v678 = vrot.slane %v513, %v677
      %v680 = vmul.f32 %v517, %v678
      %v681 = vmul.f32 %v522, %v678
      %v682 = vmul.f32 %v527, %v678
      %v683 = vmul.f32 %v532, %v678
      %v684 = vmul.f32 %v537, %v678
      %v685 = vmul.f32 %v542, %v678
      %v686 = vmul.f32 %v547, %v678
      %v687 = vmul.f32 %v552, %v678
      %v688 = vmul.f32 %v557, %v678
      %v689 = vmul.f32 %v562, %v678
      %v690 = vmul.f32 %v567, %v678
      %v691 = vmul.f32 %v572, %v678
      %v692 = vmul.f32 %v577, %v678
      %v693 = vmul.f32 %v582, %v678
      %v694 = vmul.f32 %v587, %v678
      %v695 = vmul.f32 %v592, %v678
      %v696 = vmul.f32 %v597, %v678
      %v697 = vmul.f32 %v602, %v678
      %v698 = vmul.f32 %v607, %v678
      %v699 = vmul.f32 %v612, %v678
      %v700 = vmul.f32 %v617, %v678
      %v701 = vmul.f32 %v622, %v678
      %v702 = vmul.f32 %v627, %v678
      %v703 = vmul.f32 %v632, %v678
      %v704 = vmul.f32 %v637, %v678
      %v705 = vmul.f32 %v642, %v678
      %v706 = vmul.f32 %v647, %v678
      %v707 = vmul.f32 %v652, %v678
      %v708 = vmul.f32 %v657, %v678
      %v709 = vmul.f32 %v662, %v678
      %v710 = vmul.f32 %v667, %v678
      %v711 = vmul.f32 %v672, %v678
      %v712 = vld [vmem:[%s6] sm:$0x1]
      %v714 = vlaneseq
      %v715 = vshrl.u32 %v714, 7
      %v716 = vsub.s32 0, %v715
      %v717 = vrot.slane %v712, %v716
      %v719 = vadd.f32 %v680, %v717
      %v720 = vadd.f32 %v681, %v717
      %v721 = vadd.f32 %v682, %v717
      %v722 = vadd.f32 %v683, %v717
      %v723 = vadd.f32 %v684, %v717
      %v724 = vadd.f32 %v685, %v717
      %v725 = vadd.f32 %v686, %v717
      %v726 = vadd.f32 %v687, %v717
      %v727 = vadd.f32 %v688, %v717
      %v728 = vadd.f32 %v689, %v717
      %v729 = vadd.f32 %v690, %v717
      %v730 = vadd.f32 %v691, %v717
      %v731 = vadd.f32 %v692, %v717
      %v732 = vadd.f32 %v693, %v717
      %v733 = vadd.f32 %v694, %v717
      %v734 = vadd.f32 %v695, %v717
      %v735 = vadd.f32 %v696, %v717
      %v736 = vadd.f32 %v697, %v717
      %v737 = vadd.f32 %v698, %v717
      %v738 = vadd.f32 %v699, %v717
      %v739 = vadd.f32 %v700, %v717
      %v740 = vadd.f32 %v701, %v717
      %v741 = vadd.f32 %v702, %v717
      %v742 = vadd.f32 %v703, %v717
      %v743 = vadd.f32 %v704, %v717
      %v744 = vadd.f32 %v705, %v717
      %v745 = vadd.f32 %v706, %v717
      %v746 = vadd.f32 %v707, %v717
      %v747 = vadd.f32 %v708, %v717
      %v748 = vadd.f32 %v709, %v717
      %v749 = vadd.f32 %v710, %v717
      %v750 = vadd.f32 %v711, %v717
      %v751 = vmax.f32 %v719, 0.0
      %v752 = vmax.f32 %v720, 0.0
      %v753 = vmax.f32 %v721, 0.0
      %v754 = vmax.f32 %v722, 0.0
      %v755 = vmax.f32 %v723, 0.0
      %v756 = vmax.f32 %v724, 0.0
      %v757 = vmax.f32 %v725, 0.0
      %v758 = vmax.f32 %v726, 0.0
      %v759 = vmax.f32 %v727, 0.0
      %v760 = vmax.f32 %v728, 0.0
      %v761 = vmax.f32 %v729, 0.0
      %v762 = vmax.f32 %v730, 0.0
      %v763 = vmax.f32 %v731, 0.0
      %v764 = vmax.f32 %v732, 0.0
      %v765 = vmax.f32 %v733, 0.0
      %v766 = vmax.f32 %v734, 0.0
      %v767 = vmax.f32 %v735, 0.0
      %v768 = vmax.f32 %v736, 0.0
      %v769 = vmax.f32 %v737, 0.0
      %v770 = vmax.f32 %v738, 0.0
      %v771 = vmax.f32 %v739, 0.0
      %v772 = vmax.f32 %v740, 0.0
      %v773 = vmax.f32 %v741, 0.0
      %v774 = vmax.f32 %v742, 0.0
      %v775 = vmax.f32 %v743, 0.0
      %v776 = vmax.f32 %v744, 0.0
      %v777 = vmax.f32 %v745, 0.0
      %v778 = vmax.f32 %v746, 0.0
      %v779 = vmax.f32 %v747, 0.0
      %v780 = vmax.f32 %v748, 0.0
      %v781 = vmax.f32 %v749, 0.0
      %v782 = vmax.f32 %v750, 0.0
      %v783 = vpack.c.bf16 %v752, %v751
      %v784 = vpack.c.bf16 %v754, %v753
      %v785 = vpack.c.bf16 %v756, %v755
      %v786 = vpack.c.bf16 %v758, %v757
      %v787 = vpack.c.bf16 %v760, %v759
      %v788 = vpack.c.bf16 %v762, %v761
      %v789 = vpack.c.bf16 %v764, %v763
      %v790 = vpack.c.bf16 %v766, %v765
      %v791 = vpack.c.bf16 %v768, %v767
      %v792 = vpack.c.bf16 %v770, %v769
      %v793 = vpack.c.bf16 %v772, %v771
      %v794 = vpack.c.bf16 %v774, %v773
      %v795 = vpack.c.bf16 %v776, %v775
      %v796 = vpack.c.bf16 %v778, %v777
      %v797 = vpack.c.bf16 %v780, %v779
      %v798 = vpack.c.bf16 %v782, %v781
      %v799 = vld [vmem:[%s7] sm:$0xf]
      %v800 = vld [vmem:[%s7 + $0x4] sm:$0xf]
      %v801 = vld [vmem:[%s7 + $0x8] sm:$0xf]
      %v802 = vld [vmem:[%s7 + $0xc] sm:$0xf]
      %v803 = vld [vmem:[%s7 + $0x10] sm:$0xf]
      %v804 = vld [vmem:[%s7 + $0x14] sm:$0xf]
      %v805 = vld [vmem:[%s7 + $0x18] sm:$0xf]
      %v806 = vld [vmem:[%s7 + $0x1c] sm:$0xf]
      %v807 = vld [vmem:[%s8] sm:$0x1]
      %v809 = vlaneseq
      %v810 = vshrl.u32 %v809, 7
      %v811 = vsub.s32 0, %v810
      %v812 = vrot.slane %v807, %v811
      %v822 = vunpack.c.l.b16 %v799
      %v823 = vunpack.c.l.b16 %v800
      %v824 = vunpack.c.l.b16 %v801
      %v825 = vunpack.c.l.b16 %v802
      %v826 = vunpack.c.l.b16 %v803
      %v827 = vunpack.c.l.b16 %v804
      %v828 = vunpack.c.l.b16 %v805
      %v829 = vunpack.c.l.b16 %v806
      %v830 = vpack.c.b16 %v823, %v822
      %v831 = vpack.c.b16 %v825, %v824
      %v832 = vpack.c.b16 %v827, %v826
      %v833 = vpack.c.b16 %v829, %v828
      %vm838 = vcmask 523264
      %v840 = vsel %vm838, %v783, 0
      %v843 = vsel %vm838, %v784, 0
      %v846 = vsel %vm838, %v785, 0
      %v849 = vsel %vm838, %v786, 0
      %v852 = vsel %vm838, %v787, 0
      %v855 = vsel %vm838, %v788, 0
      %v858 = vsel %vm838, %v789, 0
      %v861 = vsel %vm838, %v790, 0
      %v864 = vsel %vm838, %v791, 0
      %v867 = vsel %vm838, %v792, 0
      %v870 = vsel %vm838, %v793, 0
      %v873 = vsel %vm838, %v794, 0
      %v876 = vsel %vm838, %v795, 0
      %v879 = vsel %vm838, %v796, 0
      %v882 = vsel %vm838, %v797, 0
      %v885 = vsel %vm838, %v798, 0
      %887 = vmatprep.subr.bf16.mxu0 0
      %888 = vmatpush1.bf16.msra.mxu0 %v830
      %889 = vmatprep.subr.bf16.mxu0 0
      %890 = vmatpush1.bf16.msra.mxu0 %v831
      %891 = vmatprep.subr.bf16.mxu0 0
      %892 = vmatpush1.bf16.msra.mxu0 %v832
      %893 = vmatprep.subr.bf16.mxu0 0
      %894 = vmatpush1.bf16.msra.mxu0 %v833
      %895 = vmatprep.subr.bf16.mxu0 0
      %896 = vmatpush1.bf16.msra.mxu0 0
      %897 = vmatprep.subr.bf16.mxu0 0
      %898 = vmatpush1.bf16.msra.mxu0 0
      %899 = vmatprep.subr.bf16.mxu0 0
      %900 = vmatpush1.bf16.msra.mxu0 0
      %901 = vmatprep.subr.bf16.mxu0 0
      %902 = vmatpush1.bf16.msra.mxu0 0
      %903 = vmatprep.subr.bf16.mxu0 0
      %904 = vmatpush1.bf16.msra.mxu0 0
      %905 = vmatprep.subr.bf16.mxu0 0
      %906 = vmatpush1.bf16.msra.mxu0 0
      %907 = vmatprep.subr.bf16.mxu0 0
      %908 = vmatpush1.bf16.msra.mxu0 0
      %909 = vmatprep.subr.bf16.mxu0 0
      %910 = vmatpush1.bf16.msra.mxu0 0
      %911 = vmatprep.subr.bf16.mxu0 0
      %912 = vmatpush1.bf16.msra.mxu0 0
      %913 = vmatprep.subr.bf16.mxu0 0
      %914 = vmatpush1.bf16.msra.mxu0 0
      %915 = vmatprep.subr.bf16.mxu0 0
      %916 = vmatpush1.bf16.msra.mxu0 0
      %917 = vmatprep.subr.bf16.mxu0 0
      %918 = vmatpush1.bf16.msra.mxu0 0
      %919 = vmatprep.mubr.bf16.mxu0 0
      %920 = vmatmul.mubr.bf16.gmra.mrb[0].mxu0 %v840
      %v921 = vpop.f32.mrb[0].mxu0
      %v922 = vadd.f32 %v812, %v921
      %v923 = vpop.f32.mrb[0].mxu0
      %v924 = vpop.f32.mrb[0].mxu0
      %v925 = vadd.f32 %v812, %v924
      %v926 = vpop.f32.mrb[0].mxu0
      %927 = vmatprep.mubr.bf16.mxu0 0
      %928 = vmatmul.mubr.bf16.gmra.mrb[0].mxu0 %v843
      %v929 = vpop.f32.mrb[0].mxu0
      %v930 = vadd.f32 %v812, %v929
      %v931 = vpop.f32.mrb[0].mxu0
      %v932 = vpop.f32.mrb[0].mxu0
      %v933 = vadd.f32 %v812, %v932
      %v934 = vpop.f32.mrb[0].mxu0
      %935 = vmatprep.mubr.bf16.mxu0 0
      %936 = vmatmul.mubr.bf16.gmra.mrb[0].mxu0 %v846
      %v937 = vpop.f32.mrb[0].mxu0
      %v938 = vadd.f32 %v812, %v937
      %v939 = vpop.f32.mrb[0].mxu0
      %v940 = vpop.f32.mrb[0].mxu0
      %v941 = vadd.f32 %v812, %v940
      %v942 = vpop.f32.mrb[0].mxu0
      %943 = vmatprep.mubr.bf16.mxu0 0
      %944 = vmatmul.mubr.bf16.gmra.mrb[0].mxu0 %v849
      %v945 = vpop.f32.mrb[0].mxu0
      %v946 = vadd.f32 %v812, %v945
      %v947 = vpop.f32.mrb[0].mxu0
      %v948 = vpop.f32.mrb[0].mxu0
      %v949 = vadd.f32 %v812, %v948
      %v950 = vpop.f32.mrb[0].mxu0
      %951 = vmatprep.mubr.bf16.mxu0 0
      %952 = vmatmul.mubr.bf16.gmra.mrb[0].mxu0 %v852
      %v953 = vpop.f32.mrb[0].mxu0
      %v954 = vadd.f32 %v812, %v953
      %v955 = vpop.f32.mrb[0].mxu0
      %v956 = vpop.f32.mrb[0].mxu0
      %v957 = vadd.f32 %v812, %v956
      %v958 = vpop.f32.mrb[0].mxu0
      %959 = vmatprep.mubr.bf16.mxu0 0
      %960 = vmatmul.mubr.bf16.gmra.mrb[0].mxu0 %v855
      %v961 = vpop.f32.mrb[0].mxu0
      %v962 = vadd.f32 %v812, %v961
      %v963 = vpop.f32.mrb[0].mxu0
      %v964 = vpop.f32.mrb[0].mxu0
      %v965 = vadd.f32 %v812, %v964
      %v966 = vpop.f32.mrb[0].mxu0
      %967 = vmatprep.mubr.bf16.mxu0 0
      %968 = vmatmul.mubr.bf16.gmra.mrb[0].mxu0 %v858
      %v969 = vpop.f32.mrb[0].mxu0
      %v970 = vadd.f32 %v812, %v969
      %v971 = vpop.f32.mrb[0].mxu0
      %v972 = vpop.f32.mrb[0].mxu0
      %v973 = vadd.f32 %v812, %v972
      %v974 = vpop.f32.mrb[0].mxu0
      %975 = vmatprep.mubr.bf16.mxu0 0
      %976 = vmatmul.mubr.bf16.gmra.mrb[0].mxu0 %v861
      %v977 = vpop.f32.mrb[0].mxu0
      %v978 = vadd.f32 %v812, %v977
      %v979 = vpop.f32.mrb[0].mxu0
      %v980 = vpop.f32.mrb[0].mxu0
      %v981 = vadd.f32 %v812, %v980
      %v982 = vpop.f32.mrb[0].mxu0
      %983 = vmatprep.mubr.bf16.mxu0 0
      %984 = vmatmul.mubr.bf16.gmra.mrb[0].mxu0 %v864
      %v985 = vpop.f32.mrb[0].mxu0
      %v986 = vadd.f32 %v812, %v985
      %v987 = vpop.f32.mrb[0].mxu0
      %v988 = vpop.f32.mrb[0].mxu0
      %v989 = vadd.f32 %v812, %v988
      %v990 = vpop.f32.mrb[0].mxu0
      %991 = vmatprep.mubr.bf16.mxu0 0
      %992 = vmatmul.mubr.bf16.gmra.mrb[0].mxu0 %v867
      %v993 = vpop.f32.mrb[0].mxu0
      %v994 = vadd.f32 %v812, %v993
      %v995 = vpop.f32.mrb[0].mxu0
      %v996 = vpop.f32.mrb[0].mxu0
      %v997 = vadd.f32 %v812, %v996
      %v998 = vpop.f32.mrb[0].mxu0
      %999 = vmatprep.mubr.bf16.mxu0 0
      %1000 = vmatmul.mubr.bf16.gmra.mrb[0].mxu0 %v870
      %v1001 = vpop.f32.mrb[0].mxu0
      %v1002 = vadd.f32 %v812, %v1001
      %v1003 = vpop.f32.mrb[0].mxu0
      %v1004 = vpop.f32.mrb[0].mxu0
      %v1005 = vadd.f32 %v812, %v1004
      %v1006 = vpop.f32.mrb[0].mxu0
      %1007 = vmatprep.mubr.bf16.mxu0 0
      %1008 = vmatmul.mubr.bf16.gmra.mrb[0].mxu0 %v873
      %v1009 = vpop.f32.mrb[0].mxu0
      %v1010 = vadd.f32 %v812, %v1009
      %v1011 = vpop.f32.mrb[0].mxu0
      %v1012 = vpop.f32.mrb[0].mxu0
      %v1013 = vadd.f32 %v812, %v1012
      %v1014 = vpop.f32.mrb[0].mxu0
      %1015 = vmatprep.mubr.bf16.mxu0 0
      %1016 = vmatmul.mubr.bf16.gmra.mrb[0].mxu0 %v876
      %v1017 = vpop.f32.mrb[0].mxu0
      %v1018 = vadd.f32 %v812, %v1017
      %v1019 = vpop.f32.mrb[0].mxu0
      %v1020 = vpop.f32.mrb[0].mxu0
      %v1021 = vadd.f32 %v812, %v1020
      %v1022 = vpop.f32.mrb[0].mxu0
      %1023 = vmatprep.mubr.bf16.mxu0 0
      %1024 = vmatmul.mubr.bf16.gmra.mrb[0].mxu0 %v879
      %v1025 = vpop.f32.mrb[0].mxu0
      %v1026 = vadd.f32 %v812, %v1025
      %v1027 = vpop.f32.mrb[0].mxu0
      %v1028 = vpop.f32.mrb[0].mxu0
      %v1029 = vadd.f32 %v812, %v1028
      %v1030 = vpop.f32.mrb[0].mxu0
      %1031 = vmatprep.mubr.bf16.mxu0 0
      %1032 = vmatmul.mubr.bf16.gmra.mrb[0].mxu0 %v882
      %v1033 = vpop.f32.mrb[0].mxu0
      %v1034 = vadd.f32 %v812, %v1033
      %v1035 = vpop.f32.mrb[0].mxu0
      %v1036 = vpop.f32.mrb[0].mxu0
      %v1037 = vadd.f32 %v812, %v1036
      %v1038 = vpop.f32.mrb[0].mxu0
      %1039 = vmatprep.mubr.bf16.mxu0 0
      %1040 = vmatmul.mubr.bf16.gmra.mrb[0].mxu0 %v885
      %v1041 = vpop.f32.mrb[0].mxu0
      %v1042 = vadd.f32 %v812, %v1041
      %v1043 = vpop.f32.mrb[0].mxu0
      %v1044 = vpop.f32.mrb[0].mxu0
      %v1045 = vadd.f32 %v812, %v1044
      %v1046 = vpop.f32.mrb[0].mxu0
      %1047 = vdwg.mxu0
      %v1048 = vld [vmem:[%s462] sm:$0xff]
      %v1049 = vld [vmem:[%s462 + $0x8] sm:$0xff]
      %v1050 = vld [vmem:[%s462 + $0x10] sm:$0xff]
      %v1051 = vld [vmem:[%s462 + $0x18] sm:$0xff]
      %v1052 = vld [vmem:[%s462 + $0x20] sm:$0xff]
      %v1053 = vld [vmem:[%s462 + $0x28] sm:$0xff]
      %v1054 = vld [vmem:[%s462 + $0x30] sm:$0xff]
      %v1055 = vld [vmem:[%s462 + $0x38] sm:$0xff]
      %v1056 = vld [vmem:[%s462 + $0x40] sm:$0xff]
      %v1057 = vld [vmem:[%s462 + $0x48] sm:$0xff]
      %v1058 = vld [vmem:[%s462 + $0x50] sm:$0xff]
      %v1059 = vld [vmem:[%s462 + $0x58] sm:$0xff]
      %v1060 = vld [vmem:[%s462 + $0x60] sm:$0xff]
      %v1061 = vld [vmem:[%s462 + $0x68] sm:$0xff]
      %v1062 = vld [vmem:[%s462 + $0x70] sm:$0xff]
      %v1063 = vld [vmem:[%s462 + $0x78] sm:$0xff]
      %v1064 = vld [vmem:[%s462 + $0x80] sm:$0xff]
      %v1065 = vld [vmem:[%s462 + $0x88] sm:$0xff]
      %v1066 = vld [vmem:[%s462 + $0x90] sm:$0xff]
      %v1067 = vld [vmem:[%s462 + $0x98] sm:$0xff]
      %v1068 = vld [vmem:[%s462 + $0xa0] sm:$0xff]
      %v1069 = vld [vmem:[%s462 + $0xa8] sm:$0xff]
      %v1070 = vld [vmem:[%s462 + $0xb0] sm:$0xff]
      %v1071 = vld [vmem:[%s462 + $0xb8] sm:$0xff]
      %v1072 = vld [vmem:[%s462 + $0xc0] sm:$0xff]
      %v1073 = vld [vmem:[%s462 + $0xc8] sm:$0xff]
      %v1074 = vld [vmem:[%s462 + $0xd0] sm:$0xff]
      %v1075 = vld [vmem:[%s462 + $0xd8] sm:$0xff]
      %v1076 = vld [vmem:[%s462 + $0xe0] sm:$0xff]
      %v1077 = vld [vmem:[%s462 + $0xe8] sm:$0xff]
      %v1078 = vld [vmem:[%s462 + $0xf0] sm:$0xff]
      %v1079 = vld [vmem:[%s462 + $0xf8] sm:$0xff]
      %v1080 = vlaneseq
      %v1081 = vand.u32 %v1080, 127
      %1082 = vset.pattern.permute.xlu0 0
      %1083 = vperm.xlu0 %1082, %v1048
      %v1084 = vpop.permute.xlu0 %1083
      %1085 = vset.pattern.permute.xlu0 0
      %1086 = vperm.xlu0 %1085, %v1049
      %v1087 = vpop.permute.xlu0 %1086
      %1088 = vset.pattern.permute.xlu0 0
      %1089 = vperm.xlu0 %1088, %v1050
      %v1090 = vpop.permute.xlu0 %1089
      %1091 = vset.pattern.permute.xlu0 0
      %1092 = vperm.xlu0 %1091, %v1051
      %v1093 = vpop.permute.xlu0 %1092
      %1094 = vset.pattern.permute.xlu0 0
      %1095 = vperm.xlu0 %1094, %v1052
      %v1096 = vpop.permute.xlu0 %1095
      %1097 = vset.pattern.permute.xlu0 0
      %1098 = vperm.xlu0 %1097, %v1053
      %v1099 = vpop.permute.xlu0 %1098
      %1100 = vset.pattern.permute.xlu0 0
      %1101 = vperm.xlu0 %1100, %v1054
      %v1102 = vpop.permute.xlu0 %1101
      %1103 = vset.pattern.permute.xlu0 0
      %1104 = vperm.xlu0 %1103, %v1055
      %v1105 = vpop.permute.xlu0 %1104
      %1106 = vset.pattern.permute.xlu0 0
      %1107 = vperm.xlu0 %1106, %v1056
      %v1108 = vpop.permute.xlu0 %1107
      %1109 = vset.pattern.permute.xlu0 0
      %1110 = vperm.xlu0 %1109, %v1057
      %v1111 = vpop.permute.xlu0 %1110
      %1112 = vset.pattern.permute.xlu0 0
      %1113 = vperm.xlu0 %1112, %v1058
      %v1114 = vpop.permute.xlu0 %1113
      %1115 = vset.pattern.permute.xlu0 0
      %1116 = vperm.xlu0 %1115, %v1059
      %v1117 = vpop.permute.xlu0 %1116
      %1118 = vset.pattern.permute.xlu0 0
      %1119 = vperm.xlu0 %1118, %v1060
      %v1120 = vpop.permute.xlu0 %1119
      %1121 = vset.pattern.permute.xlu0 0
      %1122 = vperm.xlu0 %1121, %v1061
      %v1123 = vpop.permute.xlu0 %1122
      %1124 = vset.pattern.permute.xlu0 0
      %1125 = vperm.xlu0 %1124, %v1062
      %v1126 = vpop.permute.xlu0 %1125
      %1127 = vset.pattern.permute.xlu0 0
      %1128 = vperm.xlu0 %1127, %v1063
      %v1129 = vpop.permute.xlu0 %1128
      %1130 = vset.pattern.permute.xlu0 0
      %1131 = vperm.xlu0 %1130, %v1064
      %v1132 = vpop.permute.xlu0 %1131
      %1133 = vset.pattern.permute.xlu0 0
      %1134 = vperm.xlu0 %1133, %v1065
      %v1135 = vpop.permute.xlu0 %1134
      %1136 = vset.pattern.permute.xlu0 0
      %1137 = vperm.xlu0 %1136, %v1066
      %v1138 = vpop.permute.xlu0 %1137
      %1139 = vset.pattern.permute.xlu0 0
      %1140 = vperm.xlu0 %1139, %v1067
      %v1141 = vpop.permute.xlu0 %1140
      %1142 = vset.pattern.permute.xlu0 0
      %1143 = vperm.xlu0 %1142, %v1068
      %v1144 = vpop.permute.xlu0 %1143
      %1145 = vset.pattern.permute.xlu0 0
      %1146 = vperm.xlu0 %1145, %v1069
      %v1147 = vpop.permute.xlu0 %1146
      %1148 = vset.pattern.permute.xlu0 0
      %1149 = vperm.xlu0 %1148, %v1070
      %v1150 = vpop.permute.xlu0 %1149
      %1151 = vset.pattern.permute.xlu0 0
      %1152 = vperm.xlu0 %1151, %v1071
      %v1153 = vpop.permute.xlu0 %1152
      %1154 = vset.pattern.permute.xlu0 0
      %1155 = vperm.xlu0 %1154, %v1072
      %v1156 = vpop.permute.xlu0 %1155
      %1157 = vset.pattern.permute.xlu0 0
      %1158 = vperm.xlu0 %1157, %v1073
      %v1159 = vpop.permute.xlu0 %1158
      %1160 = vset.pattern.permute.xlu0 0
      %1161 = vperm.xlu0 %1160, %v1074
      %v1162 = vpop.permute.xlu0 %1161
      %1163 = vset.pattern.permute.xlu0 0
      %1164 = vperm.xlu0 %1163, %v1075
      %v1165 = vpop.permute.xlu0 %1164
      %1166 = vset.pattern.permute.xlu0 0
      %1167 = vperm.xlu0 %1166, %v1076
      %v1168 = vpop.permute.xlu0 %1167
      %1169 = vset.pattern.permute.xlu0 0
      %1170 = vperm.xlu0 %1169, %v1077
      %v1171 = vpop.permute.xlu0 %1170
      %1172 = vset.pattern.permute.xlu0 0
      %1173 = vperm.xlu0 %1172, %v1078
      %v1174 = vpop.permute.xlu0 %1173
      %1175 = vset.pattern.permute.xlu0 0
      %1176 = vperm.xlu0 %1175, %v1079
      %v1177 = vpop.permute.xlu0 %1176
      %vm1178 = vcmp.eq.s32.totalorder %v1084, %v1081
      %vm1179 = vcmp.eq.s32.totalorder %v1087, %v1081
      %vm1180 = vcmp.eq.s32.totalorder %v1090, %v1081
      %vm1181 = vcmp.eq.s32.totalorder %v1093, %v1081
      %vm1182 = vcmp.eq.s32.totalorder %v1096, %v1081
      %vm1183 = vcmp.eq.s32.totalorder %v1099, %v1081
      %vm1184 = vcmp.eq.s32.totalorder %v1102, %v1081
      %vm1185 = vcmp.eq.s32.totalorder %v1105, %v1081
      %vm1186 = vcmp.eq.s32.totalorder %v1108, %v1081
      %vm1187 = vcmp.eq.s32.totalorder %v1111, %v1081
      %vm1188 = vcmp.eq.s32.totalorder %v1114, %v1081
      %vm1189 = vcmp.eq.s32.totalorder %v1117, %v1081
      %vm1190 = vcmp.eq.s32.totalorder %v1120, %v1081
      %vm1191 = vcmp.eq.s32.totalorder %v1123, %v1081
      %vm1192 = vcmp.eq.s32.totalorder %v1126, %v1081
      %vm1193 = vcmp.eq.s32.totalorder %v1129, %v1081
      %vm1194 = vcmp.eq.s32.totalorder %v1132, %v1081
      %vm1195 = vcmp.eq.s32.totalorder %v1135, %v1081
      %vm1196 = vcmp.eq.s32.totalorder %v1138, %v1081
      %vm1197 = vcmp.eq.s32.totalorder %v1141, %v1081
      %vm1198 = vcmp.eq.s32.totalorder %v1144, %v1081
      %vm1199 = vcmp.eq.s32.totalorder %v1147, %v1081
      %vm1200 = vcmp.eq.s32.totalorder %v1150, %v1081
      %vm1201 = vcmp.eq.s32.totalorder %v1153, %v1081
      %vm1202 = vcmp.eq.s32.totalorder %v1156, %v1081
      %vm1203 = vcmp.eq.s32.totalorder %v1159, %v1081
      %vm1204 = vcmp.eq.s32.totalorder %v1162, %v1081
      %vm1205 = vcmp.eq.s32.totalorder %v1165, %v1081
      %vm1206 = vcmp.eq.s32.totalorder %v1168, %v1081
      %vm1207 = vcmp.eq.s32.totalorder %v1171, %v1081
      %vm1208 = vcmp.eq.s32.totalorder %v1174, %v1081
      %vm1209 = vcmp.eq.s32.totalorder %v1177, %v1081
      %v1210 = vsel %vm1178, 1, 0
      %v1211 = vsel %vm1179, 1, 0
      %v1212 = vsel %vm1180, 1, 0
      %v1213 = vsel %vm1181, 1, 0
      %v1214 = vsel %vm1182, 1, 0
      %v1215 = vsel %vm1183, 1, 0
      %v1216 = vsel %vm1184, 1, 0
      %v1217 = vsel %vm1185, 1, 0
      %v1218 = vsel %vm1186, 1, 0
      %v1219 = vsel %vm1187, 1, 0
      %v1220 = vsel %vm1188, 1, 0
      %v1221 = vsel %vm1189, 1, 0
      %v1222 = vsel %vm1190, 1, 0
      %v1223 = vsel %vm1191, 1, 0
      %v1224 = vsel %vm1192, 1, 0
      %v1225 = vsel %vm1193, 1, 0
      %v1226 = vsel %vm1194, 1, 0
      %v1227 = vsel %vm1195, 1, 0
      %v1228 = vsel %vm1196, 1, 0
      %v1229 = vsel %vm1197, 1, 0
      %v1230 = vsel %vm1198, 1, 0
      %v1231 = vsel %vm1199, 1, 0
      %v1232 = vsel %vm1200, 1, 0
      %v1233 = vsel %vm1201, 1, 0
      %v1234 = vsel %vm1202, 1, 0
      %v1235 = vsel %vm1203, 1, 0
      %v1236 = vsel %vm1204, 1, 0
      %v1237 = vsel %vm1205, 1, 0
      %v1238 = vsel %vm1206, 1, 0
      %v1239 = vsel %vm1207, 1, 0
      %v1240 = vsel %vm1208, 1, 0
      %v1241 = vsel %vm1209, 1, 0
      %v1242 = vcvt.s32.f32 %v1210
      %v1243 = vcvt.s32.f32 %v1211
      %v1244 = vcvt.s32.f32 %v1212
      %v1245 = vcvt.s32.f32 %v1213
      %v1246 = vcvt.s32.f32 %v1214
      %v1247 = vcvt.s32.f32 %v1215
      %v1248 = vcvt.s32.f32 %v1216
      %v1249 = vcvt.s32.f32 %v1217
      %v1250 = vcvt.s32.f32 %v1218
      %v1251 = vcvt.s32.f32 %v1219
      %v1252 = vcvt.s32.f32 %v1220
      %v1253 = vcvt.s32.f32 %v1221
      %v1254 = vcvt.s32.f32 %v1222
      %v1255 = vcvt.s32.f32 %v1223
      %v1256 = vcvt.s32.f32 %v1224
      %v1257 = vcvt.s32.f32 %v1225
      %v1258 = vcvt.s32.f32 %v1226
      %v1259 = vcvt.s32.f32 %v1227
      %v1260 = vcvt.s32.f32 %v1228
      %v1261 = vcvt.s32.f32 %v1229
      %v1262 = vcvt.s32.f32 %v1230
      %v1263 = vcvt.s32.f32 %v1231
      %v1264 = vcvt.s32.f32 %v1232
      %v1265 = vcvt.s32.f32 %v1233
      %v1266 = vcvt.s32.f32 %v1234
      %v1267 = vcvt.s32.f32 %v1235
      %v1268 = vcvt.s32.f32 %v1236
      %v1269 = vcvt.s32.f32 %v1237
      %v1270 = vcvt.s32.f32 %v1238
      %v1271 = vcvt.s32.f32 %v1239
      %v1272 = vcvt.s32.f32 %v1240
      %v1273 = vcvt.s32.f32 %v1241
      %v1274 = vpack.c.bf16 %v1243, %v1242
      %v1275 = vpack.c.bf16 %v1245, %v1244
      %v1276 = vpack.c.bf16 %v1247, %v1246
      %v1277 = vpack.c.bf16 %v1249, %v1248
      %v1278 = vpack.c.bf16 %v1251, %v1250
      %v1279 = vpack.c.bf16 %v1253, %v1252
      %v1280 = vpack.c.bf16 %v1255, %v1254
      %v1281 = vpack.c.bf16 %v1257, %v1256
      %v1282 = vpack.c.bf16 %v1259, %v1258
      %v1283 = vpack.c.bf16 %v1261, %v1260
      %v1284 = vpack.c.bf16 %v1263, %v1262
      %v1285 = vpack.c.bf16 %v1265, %v1264
      %v1286 = vpack.c.bf16 %v1267, %v1266
      %v1287 = vpack.c.bf16 %v1269, %v1268
      %v1288 = vpack.c.bf16 %v1271, %v1270
      %v1289 = vpack.c.bf16 %v1273, %v1272
      %v1290 = vld [vmem:[%s3] sm:$0xff]
      %v1291 = vld [vmem:[%s3 + $0x8] sm:$0xff]
      %v1292 = vld [vmem:[%s3 + $0x10] sm:$0xff]
      %v1293 = vld [vmem:[%s3 + $0x18] sm:$0xff]
      %v1294 = vld [vmem:[%s3 + $0x20] sm:$0xff]
      %v1295 = vld [vmem:[%s3 + $0x28] sm:$0xff]
      %v1296 = vpack.c.bf16 %v1291, %v1290
      %v1297 = vpack.c.bf16 %v1293, %v1292
      %v1298 = vpack.c.bf16 %v1295, %v1294
      %vm1299 = vcmask 392192
      %v1301 = vsel %vm1299, %v1274, 0
      %v1304 = vsel %vm1299, %v1275, 0
      %v1307 = vsel %vm1299, %v1276, 0
      %v1310 = vsel %vm1299, %v1277, 0
      %v1313 = vsel %vm1299, %v1278, 0
      %v1316 = vsel %vm1299, %v1279, 0
      %v1319 = vsel %vm1299, %v1280, 0
      %v1322 = vsel %vm1299, %v1281, 0
      %v1325 = vsel %vm1299, %v1282, 0
      %v1328 = vsel %vm1299, %v1283, 0
      %v1331 = vsel %vm1299, %v1284, 0
      %v1334 = vsel %vm1299, %v1285, 0
      %v1337 = vsel %vm1299, %v1286, 0
      %v1340 = vsel %vm1299, %v1287, 0
      %v1343 = vsel %vm1299, %v1288, 0
      %v1346 = vsel %vm1299, %v1289, 0
      %1348 = vmatprep.subr.bf16.mxu0 0
      %1349 = vmatpush1.bf16.msra.mxu0 %v1296
      %1350 = vmatprep.subr.bf16.mxu0 0
      %1351 = vmatpush1.bf16.msra.mxu0 %v1297
      %1352 = vmatprep.subr.bf16.mxu0 0
      %1353 = vmatpush1.bf16.msra.mxu0 %v1298
      %1354 = vmatprep.subr.bf16.mxu0 0
      %1355 = vmatpush1.bf16.msra.mxu0 0
      %1356 = vmatprep.subr.bf16.mxu0 0
      %1357 = vmatpush1.bf16.msra.mxu0 0
      %1358 = vmatprep.subr.bf16.mxu0 0
      %1359 = vmatpush1.bf16.msra.mxu0 0
      %1360 = vmatprep.subr.bf16.mxu0 0
      %1361 = vmatpush1.bf16.msra.mxu0 0
      %1362 = vmatprep.subr.bf16.mxu0 0
      %1363 = vmatpush1.bf16.msra.mxu0 0
      %1364 = vmatprep.subr.bf16.mxu0 0
      %1365 = vmatpush1.bf16.msra.mxu0 0
      %1366 = vmatprep.subr.bf16.mxu0 0
      %1367 = vmatpush1.bf16.msra.mxu0 0
      %1368 = vmatprep.subr.bf16.mxu0 0
      %1369 = vmatpush1.bf16.msra.mxu0 0
      %1370 = vmatprep.subr.bf16.mxu0 0
      %1371 = vmatpush1.bf16.msra.mxu0 0
      %1372 = vmatprep.subr.bf16.mxu0 0
      %1373 = vmatpush1.bf16.msra.mxu0 0
      %1374 = vmatprep.subr.bf16.mxu0 0
      %1375 = vmatpush1.bf16.msra.mxu0 0
      %1376 = vmatprep.subr.bf16.mxu0 0
      %1377 = vmatpush1.bf16.msra.mxu0 0
      %1378 = vmatprep.subr.bf16.mxu0 0
      %1379 = vmatpush1.bf16.msra.mxu0 0
      %1380 = vmatprep.mubr.bf16.mxu0 0
      %1381 = vmatmul.mubr.bf16.gmra.mrb[0].mxu0 %v1301
      %v1382 = vpop.f32.mrb[0].mxu0
      %v1383 = vadd.f32 0.0, %v1382
      %v1384 = vpop.f32.mrb[0].mxu0
      %v1385 = vpop.f32.mrb[0].mxu0
      %v1386 = vadd.f32 0.0, %v1385
      %v1387 = vpop.f32.mrb[0].mxu0
      %1388 = vmatprep.mubr.bf16.mxu0 0
      %1389 = vmatmul.mubr.bf16.gmra.mrb[0].mxu0 %v1304
      %v1390 = vpop.f32.mrb[0].mxu0
      %v1391 = vadd.f32 0.0, %v1390
      %v1392 = vpop.f32.mrb[0].mxu0
      %v1393 = vpop.f32.mrb[0].mxu0
      %v1394 = vadd.f32 0.0, %v1393
      %v1395 = vpop.f32.mrb[0].mxu0
      %1396 = vmatprep.mubr.bf16.mxu0 0
      %1397 = vmatmul.mubr.bf16.gmra.mrb[0].mxu0 %v1307
      %v1398 = vpop.f32.mrb[0].mxu0
      %v1399 = vadd.f32 0.0, %v1398
      %v1400 = vpop.f32.mrb[0].mxu0
      %v1401 = vpop.f32.mrb[0].mxu0
      %v1402 = vadd.f32 0.0, %v1401
      %v1403 = vpop.f32.mrb[0].mxu0
      %1404 = vmatprep.mubr.bf16.mxu0 0
      %1405 = vmatmul.mubr.bf16.gmra.mrb[0].mxu0 %v1310
      %v1406 = vpop.f32.mrb[0].mxu0
      %v1407 = vadd.f32 0.0, %v1406
      %v1408 = vpop.f32.mrb[0].mxu0
      %v1409 = vpop.f32.mrb[0].mxu0
      %v1410 = vadd.f32 0.0, %v1409
      %v1411 = vpop.f32.mrb[0].mxu0
      %1412 = vmatprep.mubr.bf16.mxu0 0
      %1413 = vmatmul.mubr.bf16.gmra.mrb[0].mxu0 %v1313
      %v1414 = vpop.f32.mrb[0].mxu0
      %v1415 = vadd.f32 0.0, %v1414
      %v1416 = vpop.f32.mrb[0].mxu0
      %v1417 = vpop.f32.mrb[0].mxu0
      %v1418 = vadd.f32 0.0, %v1417
      %v1419 = vpop.f32.mrb[0].mxu0
      %1420 = vmatprep.mubr.bf16.mxu0 0
      %1421 = vmatmul.mubr.bf16.gmra.mrb[0].mxu0 %v1316
      %v1422 = vpop.f32.mrb[0].mxu0
      %v1423 = vadd.f32 0.0, %v1422
      %v1424 = vpop.f32.mrb[0].mxu0
      %v1425 = vpop.f32.mrb[0].mxu0
      %v1426 = vadd.f32 0.0, %v1425
      %v1427 = vpop.f32.mrb[0].mxu0
      %1428 = vmatprep.mubr.bf16.mxu0 0
      %1429 = vmatmul.mubr.bf16.gmra.mrb[0].mxu0 %v1319
      %v1430 = vpop.f32.mrb[0].mxu0
      %v1431 = vadd.f32 0.0, %v1430
      %v1432 = vpop.f32.mrb[0].mxu0
      %v1433 = vpop.f32.mrb[0].mxu0
      %v1434 = vadd.f32 0.0, %v1433
      %v1435 = vpop.f32.mrb[0].mxu0
      %1436 = vmatprep.mubr.bf16.mxu0 0
      %1437 = vmatmul.mubr.bf16.gmra.mrb[0].mxu0 %v1322
      %v1438 = vpop.f32.mrb[0].mxu0
      %v1439 = vadd.f32 0.0, %v1438
      %v1440 = vpop.f32.mrb[0].mxu0
      %v1441 = vpop.f32.mrb[0].mxu0
      %v1442 = vadd.f32 0.0, %v1441
      %v1443 = vpop.f32.mrb[0].mxu0
      %1444 = vmatprep.mubr.bf16.mxu0 0
      %1445 = vmatmul.mubr.bf16.gmra.mrb[0].mxu0 %v1325
      %v1446 = vpop.f32.mrb[0].mxu0
      %v1447 = vadd.f32 0.0, %v1446
      %v1448 = vpop.f32.mrb[0].mxu0
      %v1449 = vpop.f32.mrb[0].mxu0
      %v1450 = vadd.f32 0.0, %v1449
      %v1451 = vpop.f32.mrb[0].mxu0
      %1452 = vmatprep.mubr.bf16.mxu0 0
      %1453 = vmatmul.mubr.bf16.gmra.mrb[0].mxu0 %v1328
      %v1454 = vpop.f32.mrb[0].mxu0
      %v1455 = vadd.f32 0.0, %v1454
      %v1456 = vpop.f32.mrb[0].mxu0
      %v1457 = vpop.f32.mrb[0].mxu0
      %v1458 = vadd.f32 0.0, %v1457
      %v1459 = vpop.f32.mrb[0].mxu0
      %1460 = vmatprep.mubr.bf16.mxu0 0
      %1461 = vmatmul.mubr.bf16.gmra.mrb[0].mxu0 %v1331
      %v1462 = vpop.f32.mrb[0].mxu0
      %v1463 = vadd.f32 0.0, %v1462
      %v1464 = vpop.f32.mrb[0].mxu0
      %v1465 = vpop.f32.mrb[0].mxu0
      %v1466 = vadd.f32 0.0, %v1465
      %v1467 = vpop.f32.mrb[0].mxu0
      %1468 = vmatprep.mubr.bf16.mxu0 0
      %1469 = vmatmul.mubr.bf16.gmra.mrb[0].mxu0 %v1334
      %v1470 = vpop.f32.mrb[0].mxu0
      %v1471 = vadd.f32 0.0, %v1470
      %v1472 = vpop.f32.mrb[0].mxu0
      %v1473 = vpop.f32.mrb[0].mxu0
      %v1474 = vadd.f32 0.0, %v1473
      %v1475 = vpop.f32.mrb[0].mxu0
      %1476 = vmatprep.mubr.bf16.mxu0 0
      %1477 = vmatmul.mubr.bf16.gmra.mrb[0].mxu0 %v1337
      %v1478 = vpop.f32.mrb[0].mxu0
      %v1479 = vadd.f32 0.0, %v1478
      %v1480 = vpop.f32.mrb[0].mxu0
      %v1481 = vpop.f32.mrb[0].mxu0
      %v1482 = vadd.f32 0.0, %v1481
      %v1483 = vpop.f32.mrb[0].mxu0
      %1484 = vmatprep.mubr.bf16.mxu0 0
      %1485 = vmatmul.mubr.bf16.gmra.mrb[0].mxu0 %v1340
      %v1486 = vpop.f32.mrb[0].mxu0
      %v1487 = vadd.f32 0.0, %v1486
      %v1488 = vpop.f32.mrb[0].mxu0
      %v1489 = vpop.f32.mrb[0].mxu0
      %v1490 = vadd.f32 0.0, %v1489
      %v1491 = vpop.f32.mrb[0].mxu0
      %1492 = vmatprep.mubr.bf16.mxu0 0
      %1493 = vmatmul.mubr.bf16.gmra.mrb[0].mxu0 %v1343
      %v1494 = vpop.f32.mrb[0].mxu0
      %v1495 = vadd.f32 0.0, %v1494
      %v1496 = vpop.f32.mrb[0].mxu0
      %v1497 = vpop.f32.mrb[0].mxu0
      %v1498 = vadd.f32 0.0, %v1497
      %v1499 = vpop.f32.mrb[0].mxu0
      %1500 = vmatprep.mubr.bf16.mxu0 0
      %1501 = vmatmul.mubr.bf16.gmra.mrb[0].mxu0 %v1346
      %v1502 = vpop.f32.mrb[0].mxu0
      %v1503 = vadd.f32 0.0, %v1502
      %v1504 = vpop.f32.mrb[0].mxu0
      %v1505 = vpop.f32.mrb[0].mxu0
      %v1506 = vadd.f32 0.0, %v1505
      %v1507 = vpop.f32.mrb[0].mxu0
      %1508 = vdwg.mxu0
      %v1509 = vpack.c.bf16 %v1386, %v1383
      %v1510 = vpack.c.bf16 %v1394, %v1391
      %v1511 = vpack.c.bf16 %v1402, %v1399
      %v1512 = vpack.c.bf16 %v1410, %v1407
      %v1513 = vpack.c.bf16 %v1418, %v1415
      %v1514 = vpack.c.bf16 %v1426, %v1423
      %v1515 = vpack.c.bf16 %v1434, %v1431
      %v1516 = vpack.c.bf16 %v1442, %v1439
      %v1517 = vpack.c.bf16 %v1450, %v1447
      %v1518 = vpack.c.bf16 %v1458, %v1455
      %v1519 = vpack.c.bf16 %v1466, %v1463
      %v1520 = vpack.c.bf16 %v1474, %v1471
      %v1521 = vpack.c.bf16 %v1482, %v1479
      %v1522 = vpack.c.bf16 %v1490, %v1487
      %v1523 = vpack.c.bf16 %v1498, %v1495
      %v1524 = vpack.c.bf16 %v1506, %v1503
      %v1525 = vld [vmem:[%s9] sm:$0x3]
      %vm1526 = vcmask 31744
      %v1528 = vsel %vm1526, %v1509, 0
      %v1531 = vsel %vm1526, %v1510, 0
      %v1534 = vsel %vm1526, %v1511, 0
      %v1537 = vsel %vm1526, %v1512, 0
      %v1540 = vsel %vm1526, %v1513, 0
      %v1543 = vsel %vm1526, %v1514, 0
      %v1546 = vsel %vm1526, %v1515, 0
      %v1549 = vsel %vm1526, %v1516, 0
      %v1552 = vsel %vm1526, %v1517, 0
      %v1555 = vsel %vm1526, %v1518, 0
      %v1558 = vsel %vm1526, %v1519, 0
      %v1561 = vsel %vm1526, %v1520, 0
      %v1564 = vsel %vm1526, %v1521, 0
      %v1567 = vsel %vm1526, %v1522, 0
      %v1570 = vsel %vm1526, %v1523, 0
      %v1573 = vsel %vm1526, %v1524, 0
      %vm1575 = vcmask 1041408
      %v1577 = vsel %vm1575, %v1525, 0
      %1579 = vmatprep.subr.bf16.mxu0 0
      %1580 = vmatpush1.bf16.msra.mxu0 %v1577
      %1581 = vmatprep.subr.bf16.mxu0 0
      %1582 = vmatpush1.bf16.msra.mxu0 0
      %1583 = vmatprep.subr.bf16.mxu0 0
      %1584 = vmatpush1.bf16.msra.mxu0 0
      %1585 = vmatprep.subr.bf16.mxu0 0
      %1586 = vmatpush1.bf16.msra.mxu0 0
      %1587 = vmatprep.subr.bf16.mxu0 0
      %1588 = vmatpush1.bf16.msra.mxu0 0
      %1589 = vmatprep.subr.bf16.mxu0 0
      %1590 = vmatpush1.bf16.msra.mxu0 0
      %1591 = vmatprep.subr.bf16.mxu0 0
      %1592 = vmatpush1.bf16.msra.mxu0 0
      %1593 = vmatprep.subr.bf16.mxu0 0
      %1594 = vmatpush1.bf16.msra.mxu0 0
      %1595 = vmatprep.subr.bf16.mxu0 0
      %1596 = vmatpush1.bf16.msra.mxu0 0
      %1597 = vmatprep.subr.bf16.mxu0 0
      %1598 = vmatpush1.bf16.msra.mxu0 0
      %1599 = vmatprep.subr.bf16.mxu0 0
      %1600 = vmatpush1.bf16.msra.mxu0 0
      %1601 = vmatprep.subr.bf16.mxu0 0
      %1602 = vmatpush1.bf16.msra.mxu0 0
      %1603 = vmatprep.subr.bf16.mxu0 0
      %1604 = vmatpush1.bf16.msra.mxu0 0
      %1605 = vmatprep.subr.bf16.mxu0 0
      %1606 = vmatpush1.bf16.msra.mxu0 0
      %1607 = vmatprep.subr.bf16.mxu0 0
      %1608 = vmatpush1.bf16.msra.mxu0 0
      %1609 = vmatprep.subr.bf16.mxu0 0
      %1610 = vmatpush1.bf16.msra.mxu0 0
      %1611 = vmatprep.mubr.bf16.mxu0 0
      %1612 = vmatmul.mubr.bf16.gmra.mrb[0].mxu0 %v1528
      %v1613 = vpop.f32.mrb[0].mxu0
      %v1614 = vadd.f32 0.0, %v1613
      %v1615 = vpop.f32.mrb[0].mxu0
      %v1616 = vpop.f32.mrb[0].mxu0
      %v1617 = vadd.f32 0.0, %v1616
      %v1618 = vpop.f32.mrb[0].mxu0
      %1619 = vmatprep.mubr.bf16.mxu0 0
      %1620 = vmatmul.mubr.bf16.gmra.mrb[0].mxu0 %v1531
      %v1621 = vpop.f32.mrb[0].mxu0
      %v1622 = vadd.f32 0.0, %v1621
      %v1623 = vpop.f32.mrb[0].mxu0
      %v1624 = vpop.f32.mrb[0].mxu0
      %v1625 = vadd.f32 0.0, %v1624
      %v1626 = vpop.f32.mrb[0].mxu0
      %1627 = vmatprep.mubr.bf16.mxu0 0
      %1628 = vmatmul.mubr.bf16.gmra.mrb[0].mxu0 %v1534
      %v1629 = vpop.f32.mrb[0].mxu0
      %v1630 = vadd.f32 0.0, %v1629
      %v1631 = vpop.f32.mrb[0].mxu0
      %v1632 = vpop.f32.mrb[0].mxu0
      %v1633 = vadd.f32 0.0, %v1632
      %v1634 = vpop.f32.mrb[0].mxu0
      %1635 = vmatprep.mubr.bf16.mxu0 0
      %1636 = vmatmul.mubr.bf16.gmra.mrb[0].mxu0 %v1537
      %v1637 = vpop.f32.mrb[0].mxu0
      %v1638 = vadd.f32 0.0, %v1637
      %v1639 = vpop.f32.mrb[0].mxu0
      %v1640 = vpop.f32.mrb[0].mxu0
      %v1641 = vadd.f32 0.0, %v1640
      %v1642 = vpop.f32.mrb[0].mxu0
      %1643 = vmatprep.mubr.bf16.mxu0 0
      %1644 = vmatmul.mubr.bf16.gmra.mrb[0].mxu0 %v1540
      %v1645 = vpop.f32.mrb[0].mxu0
      %v1646 = vadd.f32 0.0, %v1645
      %v1647 = vpop.f32.mrb[0].mxu0
      %v1648 = vpop.f32.mrb[0].mxu0
      %v1649 = vadd.f32 0.0, %v1648
      %v1650 = vpop.f32.mrb[0].mxu0
      %1651 = vmatprep.mubr.bf16.mxu0 0
      %1652 = vmatmul.mubr.bf16.gmra.mrb[0].mxu0 %v1543
      %v1653 = vpop.f32.mrb[0].mxu0
      %v1654 = vadd.f32 0.0, %v1653
      %v1655 = vpop.f32.mrb[0].mxu0
      %v1656 = vpop.f32.mrb[0].mxu0
      %v1657 = vadd.f32 0.0, %v1656
      %v1658 = vpop.f32.mrb[0].mxu0
      %1659 = vmatprep.mubr.bf16.mxu0 0
      %1660 = vmatmul.mubr.bf16.gmra.mrb[0].mxu0 %v1546
      %v1661 = vpop.f32.mrb[0].mxu0
      %v1662 = vadd.f32 0.0, %v1661
      %v1663 = vpop.f32.mrb[0].mxu0
      %v1664 = vpop.f32.mrb[0].mxu0
      %v1665 = vadd.f32 0.0, %v1664
      %v1666 = vpop.f32.mrb[0].mxu0
      %1667 = vmatprep.mubr.bf16.mxu0 0
      %1668 = vmatmul.mubr.bf16.gmra.mrb[0].mxu0 %v1549
      %v1669 = vpop.f32.mrb[0].mxu0
      %v1670 = vadd.f32 0.0, %v1669
      %v1671 = vpop.f32.mrb[0].mxu0
      %v1672 = vpop.f32.mrb[0].mxu0
      %v1673 = vadd.f32 0.0, %v1672
      %v1674 = vpop.f32.mrb[0].mxu0
      %1675 = vmatprep.mubr.bf16.mxu0 0
      %1676 = vmatmul.mubr.bf16.gmra.mrb[0].mxu0 %v1552
      %v1677 = vpop.f32.mrb[0].mxu0
      %v1678 = vadd.f32 0.0, %v1677
      %v1679 = vpop.f32.mrb[0].mxu0
      %v1680 = vpop.f32.mrb[0].mxu0
      %v1681 = vadd.f32 0.0, %v1680
      %v1682 = vpop.f32.mrb[0].mxu0
      %1683 = vmatprep.mubr.bf16.mxu0 0
      %1684 = vmatmul.mubr.bf16.gmra.mrb[0].mxu0 %v1555
      %v1685 = vpop.f32.mrb[0].mxu0
      %v1686 = vadd.f32 0.0, %v1685
      %v1687 = vpop.f32.mrb[0].mxu0
      %v1688 = vpop.f32.mrb[0].mxu0
      %v1689 = vadd.f32 0.0, %v1688
      %v1690 = vpop.f32.mrb[0].mxu0
      %1691 = vmatprep.mubr.bf16.mxu0 0
      %1692 = vmatmul.mubr.bf16.gmra.mrb[0].mxu0 %v1558
      %v1693 = vpop.f32.mrb[0].mxu0
      %v1694 = vadd.f32 0.0, %v1693
      %v1695 = vpop.f32.mrb[0].mxu0
      %v1696 = vpop.f32.mrb[0].mxu0
      %v1697 = vadd.f32 0.0, %v1696
      %v1698 = vpop.f32.mrb[0].mxu0
      %1699 = vmatprep.mubr.bf16.mxu0 0
      %1700 = vmatmul.mubr.bf16.gmra.mrb[0].mxu0 %v1561
      %v1701 = vpop.f32.mrb[0].mxu0
      %v1702 = vadd.f32 0.0, %v1701
      %v1703 = vpop.f32.mrb[0].mxu0
      %v1704 = vpop.f32.mrb[0].mxu0
      %v1705 = vadd.f32 0.0, %v1704
      %v1706 = vpop.f32.mrb[0].mxu0
      %1707 = vmatprep.mubr.bf16.mxu0 0
      %1708 = vmatmul.mubr.bf16.gmra.mrb[0].mxu0 %v1564
      %v1709 = vpop.f32.mrb[0].mxu0
      %v1710 = vadd.f32 0.0, %v1709
      %v1711 = vpop.f32.mrb[0].mxu0
      %v1712 = vpop.f32.mrb[0].mxu0
      %v1713 = vadd.f32 0.0, %v1712
      %v1714 = vpop.f32.mrb[0].mxu0
      %1715 = vmatprep.mubr.bf16.mxu0 0
      %1716 = vmatmul.mubr.bf16.gmra.mrb[0].mxu0 %v1567
      %v1717 = vpop.f32.mrb[0].mxu0
      %v1718 = vadd.f32 0.0, %v1717
      %v1719 = vpop.f32.mrb[0].mxu0
      %v1720 = vpop.f32.mrb[0].mxu0
      %v1721 = vadd.f32 0.0, %v1720
      %v1722 = vpop.f32.mrb[0].mxu0
      %1723 = vmatprep.mubr.bf16.mxu0 0
      %1724 = vmatmul.mubr.bf16.gmra.mrb[0].mxu0 %v1570
      %v1725 = vpop.f32.mrb[0].mxu0
      %v1726 = vadd.f32 0.0, %v1725
      %v1727 = vpop.f32.mrb[0].mxu0
      %v1728 = vpop.f32.mrb[0].mxu0
      %v1729 = vadd.f32 0.0, %v1728
      %v1730 = vpop.f32.mrb[0].mxu0
      %1731 = vmatprep.mubr.bf16.mxu0 0
      %1732 = vmatmul.mubr.bf16.gmra.mrb[0].mxu0 %v1573
      %v1733 = vpop.f32.mrb[0].mxu0
      %v1734 = vadd.f32 0.0, %v1733
      %v1735 = vpop.f32.mrb[0].mxu0
      %v1736 = vpop.f32.mrb[0].mxu0
      %v1737 = vadd.f32 0.0, %v1736
      %v1738 = vpop.f32.mrb[0].mxu0
      %1739 = vdwg.mxu0
      %v1740 = vmul.f32 %v1614, %v922
      %v1741 = vmul.f32 %v1617, %v925
      %v1742 = vmul.f32 %v1622, %v930
      %v1743 = vmul.f32 %v1625, %v933
      %v1744 = vmul.f32 %v1630, %v938
      %v1745 = vmul.f32 %v1633, %v941
      %v1746 = vmul.f32 %v1638, %v946
      %v1747 = vmul.f32 %v1641, %v949
      %v1748 = vmul.f32 %v1646, %v954
      %v1749 = vmul.f32 %v1649, %v957
      %v1750 = vmul.f32 %v1654, %v962
      %v1751 = vmul.f32 %v1657, %v965
      %v1752 = vmul.f32 %v1662, %v970
      %v1753 = vmul.f32 %v1665, %v973
      %v1754 = vmul.f32 %v1670, %v978
      %v1755 = vmul.f32 %v1673, %v981
      %v1756 = vmul.f32 %v1678, %v986
      %v1757 = vmul.f32 %v1681, %v989
      %v1758 = vmul.f32 %v1686, %v994
      %v1759 = vmul.f32 %v1689, %v997
      %v1760 = vmul.f32 %v1694, %v1002
      %v1761 = vmul.f32 %v1697, %v1005
      %v1762 = vmul.f32 %v1702, %v1010
      %v1763 = vmul.f32 %v1705, %v1013
      %v1764 = vmul.f32 %v1710, %v1018
      %v1765 = vmul.f32 %v1713, %v1021
      %v1766 = vmul.f32 %v1718, %v1026
      %v1767 = vmul.f32 %v1721, %v1029
      %v1768 = vmul.f32 %v1726, %v1034
      %v1769 = vmul.f32 %v1729, %v1037
      %v1770 = vmul.f32 %v1734, %v1042
      %v1771 = vmul.f32 %v1737, %v1045
      %v1772 = vpack.c.bf16 %v1741, %v1740
      %v1773 = vpack.c.bf16 %v1743, %v1742
      %v1774 = vpack.c.bf16 %v1745, %v1744
      %v1775 = vpack.c.bf16 %v1747, %v1746
      %v1776 = vpack.c.bf16 %v1749, %v1748
      %v1777 = vpack.c.bf16 %v1751, %v1750
      %v1778 = vpack.c.bf16 %v1753, %v1752
      %v1779 = vpack.c.bf16 %v1755, %v1754
      %v1780 = vpack.c.bf16 %v1757, %v1756
      %v1781 = vpack.c.bf16 %v1759, %v1758
      %v1782 = vpack.c.bf16 %v1761, %v1760
      %v1783 = vpack.c.bf16 %v1763, %v1762
      %v1784 = vpack.c.bf16 %v1765, %v1764
      %v1785 = vpack.c.bf16 %v1767, %v1766
      %v1786 = vpack.c.bf16 %v1769, %v1768
      %v1787 = vpack.c.bf16 %v1771, %v1770
      %v1788 = vld [vmem:[%s10] sm:$0xf]
      %v1789 = vld [vmem:[%s10 + $0x4] sm:$0xf]
      %v1790 = vld [vmem:[%s10 + $0x8] sm:$0xf]
      %v1791 = vld [vmem:[%s10 + $0xc] sm:$0xf]
      %v1792 = vld [vmem:[%s10 + $0x10] sm:$0xf]
      %v1793 = vld [vmem:[%s10 + $0x14] sm:$0xf]
      %v1794 = vld [vmem:[%s10 + $0x18] sm:$0xf]
      %v1795 = vld [vmem:[%s10 + $0x1c] sm:$0xf]
      %v1796 = vld [vmem:[%s10 + $0x20] sm:$0xf]
      %v1797 = vld [vmem:[%s10 + $0x24] sm:$0xf]
      %v1798 = vld [vmem:[%s10 + $0x28] sm:$0xf]
      %v1799 = vld [vmem:[%s10 + $0x2c] sm:$0xf]
      %v1800 = vld [vmem:[%s10 + $0x30] sm:$0xf]
      %v1801 = vld [vmem:[%s10 + $0x34] sm:$0xf]
      %v1802 = vld [vmem:[%s10 + $0x38] sm:$0xf]
      %v1803 = vld [vmem:[%s10 + $0x3c] sm:$0xf]
      %v1820 = vunpack.c.l.b16 %v1788
      %v1821 = vunpack.c.l.b16 %v1789
      %v1822 = vunpack.c.l.b16 %v1790
      %v1823 = vunpack.c.l.b16 %v1791
      %v1824 = vunpack.c.l.b16 %v1792
      %v1825 = vunpack.c.l.b16 %v1793
      %v1826 = vunpack.c.l.b16 %v1794
      %v1827 = vunpack.c.l.b16 %v1795
      %v1828 = vunpack.c.l.b16 %v1796
      %v1829 = vunpack.c.l.b16 %v1797
      %v1830 = vunpack.c.l.b16 %v1798
      %v1831 = vunpack.c.l.b16 %v1799
      %v1832 = vunpack.c.l.b16 %v1800
      %v1833 = vunpack.c.l.b16 %v1801
      %v1834 = vunpack.c.l.b16 %v1802
      %v1835 = vunpack.c.l.b16 %v1803
      %v1836 = vpack.c.b16 %v1821, %v1820
      %v1837 = vpack.c.b16 %v1823, %v1822
      %v1838 = vpack.c.b16 %v1825, %v1824
      %v1839 = vpack.c.b16 %v1827, %v1826
      %v1840 = vpack.c.b16 %v1829, %v1828
      %v1841 = vpack.c.b16 %v1831, %v1830
      %v1842 = vpack.c.b16 %v1833, %v1832
      %v1843 = vpack.c.b16 %v1835, %v1834
      %1852 = vmatprep.subr.bf16.mxu0 0
      %1853 = vmatpush1.bf16.msra.mxu0 %v1836
      %1854 = vmatprep.subr.bf16.mxu0 0
      %1855 = vmatpush1.bf16.msra.mxu0 %v1837
      %1856 = vmatprep.subr.bf16.mxu0 0
      %1857 = vmatpush1.bf16.msra.mxu0 %v1838
      %1858 = vmatprep.subr.bf16.mxu0 0
      %1859 = vmatpush1.bf16.msra.mxu0 %v1839
      %1860 = vmatprep.subr.bf16.mxu0 0
      %1861 = vmatpush1.bf16.msra.mxu0 %v1840
      %1862 = vmatprep.subr.bf16.mxu0 0
      %1863 = vmatpush1.bf16.msra.mxu0 %v1841
      %1864 = vmatprep.subr.bf16.mxu0 0
      %1865 = vmatpush1.bf16.msra.mxu0 %v1842
      %1866 = vmatprep.subr.bf16.mxu0 0
      %1867 = vmatpush1.bf16.msra.mxu0 %v1843
      %1868 = vmatprep.subr.bf16.mxu0 0
      %1869 = vmatpush1.bf16.msra.mxu0 0
      %1870 = vmatprep.subr.bf16.mxu0 0
      %1871 = vmatpush1.bf16.msra.mxu0 0
      %1872 = vmatprep.subr.bf16.mxu0 0
      %1873 = vmatpush1.bf16.msra.mxu0 0
      %1874 = vmatprep.subr.bf16.mxu0 0
      %1875 = vmatpush1.bf16.msra.mxu0 0
      %1876 = vmatprep.subr.bf16.mxu0 0
      %1877 = vmatpush1.bf16.msra.mxu0 0
      %1878 = vmatprep.subr.bf16.mxu0 0
      %1879 = vmatpush1.bf16.msra.mxu0 0
      %1880 = vmatprep.subr.bf16.mxu0 0
      %1881 = vmatpush1.bf16.msra.mxu0 0
      %1882 = vmatprep.subr.bf16.mxu0 0
      %1883 = vmatpush1.bf16.msra.mxu0 0
      %1884 = vmatprep.mubr.bf16.mxu0 0
      %1885 = vmatmul.mubr.bf16.gmra.mrb[0].mxu0 %v1772
      %v1886 = vpop.f32.mrb[0].mxu0
      %v1887 = vadd.f32 0.0, %v1886
      %v1888 = vpop.f32.mrb[0].mxu0
      %v1889 = vpop.f32.mrb[0].mxu0
      %v1890 = vadd.f32 0.0, %v1889
      %v1891 = vpop.f32.mrb[0].mxu0
      %1892 = vmatprep.mubr.bf16.mxu0 0
      %1893 = vmatmul.mubr.bf16.gmra.mrb[0].mxu0 %v1773
      %v1894 = vpop.f32.mrb[0].mxu0
      %v1895 = vadd.f32 0.0, %v1894
      %v1896 = vpop.f32.mrb[0].mxu0
      %v1897 = vpop.f32.mrb[0].mxu0
      %v1898 = vadd.f32 0.0, %v1897
      %v1899 = vpop.f32.mrb[0].mxu0
      %1900 = vmatprep.mubr.bf16.mxu0 0
      %1901 = vmatmul.mubr.bf16.gmra.mrb[0].mxu0 %v1774
      %v1902 = vpop.f32.mrb[0].mxu0
      %v1903 = vadd.f32 0.0, %v1902
      %v1904 = vpop.f32.mrb[0].mxu0
      %v1905 = vpop.f32.mrb[0].mxu0
      %v1906 = vadd.f32 0.0, %v1905
      %v1907 = vpop.f32.mrb[0].mxu0
      %1908 = vmatprep.mubr.bf16.mxu0 0
      %1909 = vmatmul.mubr.bf16.gmra.mrb[0].mxu0 %v1775
      %v1910 = vpop.f32.mrb[0].mxu0
      %v1911 = vadd.f32 0.0, %v1910
      %v1912 = vpop.f32.mrb[0].mxu0
      %v1913 = vpop.f32.mrb[0].mxu0
      %v1914 = vadd.f32 0.0, %v1913
      %v1915 = vpop.f32.mrb[0].mxu0
      %1916 = vmatprep.mubr.bf16.mxu0 0
      %1917 = vmatmul.mubr.bf16.gmra.mrb[0].mxu0 %v1776
      %v1918 = vpop.f32.mrb[0].mxu0
      %v1919 = vadd.f32 0.0, %v1918
      %v1920 = vpop.f32.mrb[0].mxu0
      %v1921 = vpop.f32.mrb[0].mxu0
      %v1922 = vadd.f32 0.0, %v1921
      %v1923 = vpop.f32.mrb[0].mxu0
      %1924 = vmatprep.mubr.bf16.mxu0 0
      %1925 = vmatmul.mubr.bf16.gmra.mrb[0].mxu0 %v1777
      %v1926 = vpop.f32.mrb[0].mxu0
      %v1927 = vadd.f32 0.0, %v1926
      %v1928 = vpop.f32.mrb[0].mxu0
      %v1929 = vpop.f32.mrb[0].mxu0
      %v1930 = vadd.f32 0.0, %v1929
      %v1931 = vpop.f32.mrb[0].mxu0
      %1932 = vmatprep.mubr.bf16.mxu0 0
      %1933 = vmatmul.mubr.bf16.gmra.mrb[0].mxu0 %v1778
      %v1934 = vpop.f32.mrb[0].mxu0
      %v1935 = vadd.f32 0.0, %v1934
      %v1936 = vpop.f32.mrb[0].mxu0
      %v1937 = vpop.f32.mrb[0].mxu0
      %v1938 = vadd.f32 0.0, %v1937
      %v1939 = vpop.f32.mrb[0].mxu0
      %1940 = vmatprep.mubr.bf16.mxu0 0
      %1941 = vmatmul.mubr.bf16.gmra.mrb[0].mxu0 %v1779
      %v1942 = vpop.f32.mrb[0].mxu0
      %v1943 = vadd.f32 0.0, %v1942
      %v1944 = vpop.f32.mrb[0].mxu0
      %v1945 = vpop.f32.mrb[0].mxu0
      %v1946 = vadd.f32 0.0, %v1945
      %v1947 = vpop.f32.mrb[0].mxu0
      %1948 = vmatprep.mubr.bf16.mxu0 0
      %1949 = vmatmul.mubr.bf16.gmra.mrb[0].mxu0 %v1780
      %v1950 = vpop.f32.mrb[0].mxu0
      %v1951 = vadd.f32 0.0, %v1950
      %v1952 = vpop.f32.mrb[0].mxu0
      %v1953 = vpop.f32.mrb[0].mxu0
      %v1954 = vadd.f32 0.0, %v1953
      %v1955 = vpop.f32.mrb[0].mxu0
      %1956 = vmatprep.mubr.bf16.mxu0 0
      %1957 = vmatmul.mubr.bf16.gmra.mrb[0].mxu0 %v1781
      %v1958 = vpop.f32.mrb[0].mxu0
      %v1959 = vadd.f32 0.0, %v1958
      %v1960 = vpop.f32.mrb[0].mxu0
      %v1961 = vpop.f32.mrb[0].mxu0
      %v1962 = vadd.f32 0.0, %v1961
      %v1963 = vpop.f32.mrb[0].mxu0
      %1964 = vmatprep.mubr.bf16.mxu0 0
      %1965 = vmatmul.mubr.bf16.gmra.mrb[0].mxu0 %v1782
      %v1966 = vpop.f32.mrb[0].mxu0
      %v1967 = vadd.f32 0.0, %v1966
      %v1968 = vpop.f32.mrb[0].mxu0
      %v1969 = vpop.f32.mrb[0].mxu0
      %v1970 = vadd.f32 0.0, %v1969
      %v1971 = vpop.f32.mrb[0].mxu0
      %1972 = vmatprep.mubr.bf16.mxu0 0
      %1973 = vmatmul.mubr.bf16.gmra.mrb[0].mxu0 %v1783
      %v1974 = vpop.f32.mrb[0].mxu0
      %v1975 = vadd.f32 0.0, %v1974
      %v1976 = vpop.f32.mrb[0].mxu0
      %v1977 = vpop.f32.mrb[0].mxu0
      %v1978 = vadd.f32 0.0, %v1977
      %v1979 = vpop.f32.mrb[0].mxu0
      %1980 = vmatprep.mubr.bf16.mxu0 0
      %1981 = vmatmul.mubr.bf16.gmra.mrb[0].mxu0 %v1784
      %v1982 = vpop.f32.mrb[0].mxu0
      %v1983 = vadd.f32 0.0, %v1982
      %v1984 = vpop.f32.mrb[0].mxu0
      %v1985 = vpop.f32.mrb[0].mxu0
      %v1986 = vadd.f32 0.0, %v1985
      %v1987 = vpop.f32.mrb[0].mxu0
      %1988 = vmatprep.mubr.bf16.mxu0 0
      %1989 = vmatmul.mubr.bf16.gmra.mrb[0].mxu0 %v1785
      %v1990 = vpop.f32.mrb[0].mxu0
      %v1991 = vadd.f32 0.0, %v1990
      %v1992 = vpop.f32.mrb[0].mxu0
      %v1993 = vpop.f32.mrb[0].mxu0
      %v1994 = vadd.f32 0.0, %v1993
      %v1995 = vpop.f32.mrb[0].mxu0
      %1996 = vmatprep.mubr.bf16.mxu0 0
      %1997 = vmatmul.mubr.bf16.gmra.mrb[0].mxu0 %v1786
      %v1998 = vpop.f32.mrb[0].mxu0
      %v1999 = vadd.f32 0.0, %v1998
      %v2000 = vpop.f32.mrb[0].mxu0
      %v2001 = vpop.f32.mrb[0].mxu0
      %v2002 = vadd.f32 0.0, %v2001
      %v2003 = vpop.f32.mrb[0].mxu0
      %2004 = vmatprep.mubr.bf16.mxu0 0
      %2005 = vmatmul.mubr.bf16.gmra.mrb[0].mxu0 %v1787
      %v2006 = vpop.f32.mrb[0].mxu0
      %v2007 = vadd.f32 0.0, %v2006
      %v2008 = vpop.f32.mrb[0].mxu0
      %v2009 = vpop.f32.mrb[0].mxu0
      %v2010 = vadd.f32 0.0, %v2009
      %v2011 = vpop.f32.mrb[0].mxu0
      %2012 = vdwg.mxu0
      %v2013 = vlaneseq
      %v2014 = vshrl.u32 %v2013, 7
      %v2015 = vadd.s32 %v2014, 8
      %v2016 = vadd.s32 %v2014, 16
      %v2017 = vadd.s32 %v2014, 24
      %v2018 = vadd.s32 %v2014, 32
      %v2019 = vadd.s32 %v2014, 40
      %v2020 = vld [vmem:[%s467] sm:$0x3]
      %v2021 = vlaneseq
      %v2022 = vshrl.u32 %v2021, 7
      %v2023 = vsub.s32 0, %v2022
      %v2024 = vrot.slane %v2020, %v2023
      %v2025 = vlaneseq
      %v2026 = vshrl.u32 %v2025, 7
      %v2027 = vsub.s32 1, %v2026
      %v2028 = vrot.slane %v2020, %v2027
      %vm2029 = vcmp.eq.s32.totalorder %v2014, %v2024
      %vm2030 = vcmp.eq.s32.totalorder %v2014, %v2028
      %vm2031 = vcmp.eq.s32.totalorder %v2015, %v2024
      %vm2032 = vcmp.eq.s32.totalorder %v2015, %v2028
      %vm2033 = vcmp.eq.s32.totalorder %v2016, %v2024
      %vm2034 = vcmp.eq.s32.totalorder %v2016, %v2028
      %vm2035 = vcmp.eq.s32.totalorder %v2017, %v2024
      %vm2036 = vcmp.eq.s32.totalorder %v2017, %v2028
      %vm2037 = vcmp.eq.s32.totalorder %v2018, %v2024
      %vm2038 = vcmp.eq.s32.totalorder %v2018, %v2028
      %vm2039 = vcmp.eq.s32.totalorder %v2019, %v2024
      %vm2040 = vcmp.eq.s32.totalorder %v2019, %v2028
      %v2041 = vsel %vm2029, 1, 0
      %v2042 = vsel %vm2030, 1, 0
      %v2043 = vsel %vm2031, 1, 0
      %v2044 = vsel %vm2032, 1, 0
      %v2045 = vsel %vm2033, 1, 0
      %v2046 = vsel %vm2034, 1, 0
      %v2047 = vsel %vm2035, 1, 0
      %v2048 = vsel %vm2036, 1, 0
      %v2049 = vsel %vm2037, 1, 0
      %v2050 = vsel %vm2038, 1, 0
      %v2051 = vsel %vm2039, 1, 0
      %v2052 = vsel %vm2040, 1, 0
      %v2053 = vcvt.s32.f32 %v2041
      %v2054 = vcvt.s32.f32 %v2042
      %v2055 = vcvt.s32.f32 %v2043
      %v2056 = vcvt.s32.f32 %v2044
      %v2057 = vcvt.s32.f32 %v2045
      %v2058 = vcvt.s32.f32 %v2046
      %v2059 = vcvt.s32.f32 %v2047
      %v2060 = vcvt.s32.f32 %v2048
      %v2061 = vcvt.s32.f32 %v2049
      %v2062 = vcvt.s32.f32 %v2050
      %v2063 = vcvt.s32.f32 %v2051
      %v2064 = vcvt.s32.f32 %v2052
      %v2065 = vpack.c.bf16 %v2055, %v2053
      %v2066 = vpack.c.bf16 %v2056, %v2054
      %v2067 = vpack.c.bf16 %v2059, %v2057
      %v2068 = vpack.c.bf16 %v2060, %v2058
      %v2069 = vpack.c.bf16 %v2063, %v2061
      %v2070 = vpack.c.bf16 %v2064, %v2062
      %v2071 = vld [vmem:[%s13] sm:$0xff]
      %v2072 = vld [vmem:[%s13 + $0x8] sm:$0xff]
      %v2073 = vld [vmem:[%s13 + $0x10] sm:$0xff]
      %v2074 = vld [vmem:[%s13 + $0x18] sm:$0xff]
      %v2075 = vld [vmem:[%s13 + $0x20] sm:$0xff]
      %v2076 = vld [vmem:[%s13 + $0x28] sm:$0xff]
      %v2077 = vpack.c.bf16 %v1890, %v1887
      %v2078 = vpack.c.bf16 %v1898, %v1895
      %v2079 = vpack.c.bf16 %v1906, %v1903
      %v2080 = vpack.c.bf16 %v1914, %v1911
      %v2081 = vpack.c.bf16 %v1922, %v1919
      %v2082 = vpack.c.bf16 %v1930, %v1927
      %v2083 = vpack.c.bf16 %v1938, %v1935
      %v2084 = vpack.c.bf16 %v1946, %v1943
      %v2085 = vpack.c.bf16 %v1954, %v1951
      %v2086 = vpack.c.bf16 %v1962, %v1959
      %v2087 = vpack.c.bf16 %v1970, %v1967
      %v2088 = vpack.c.bf16 %v1978, %v1975
      %v2089 = vpack.c.bf16 %v1986, %v1983
      %v2090 = vpack.c.bf16 %v1994, %v1991
      %v2091 = vpack.c.bf16 %v2002, %v1999
      %v2092 = vpack.c.bf16 %v2010, %v2007
      %2093 = vmatprep.subr.bf16.mxu0 0
      %2094 = vmatpush1.bf16.msra.mxu0 %v2077
      %2095 = vmatprep.subr.bf16.mxu0 0
      %2096 = vmatpush1.bf16.msra.mxu0 %v2078
      %2097 = vmatprep.subr.bf16.mxu0 0
      %2098 = vmatpush1.bf16.msra.mxu0 %v2079
      %2099 = vmatprep.subr.bf16.mxu0 0
      %2100 = vmatpush1.bf16.msra.mxu0 %v2080
      %2101 = vmatprep.subr.bf16.mxu0 0
      %2102 = vmatpush1.bf16.msra.mxu0 %v2081
      %2103 = vmatprep.subr.bf16.mxu0 0
      %2104 = vmatpush1.bf16.msra.mxu0 %v2082
      %2105 = vmatprep.subr.bf16.mxu0 0
      %2106 = vmatpush1.bf16.msra.mxu0 %v2083
      %2107 = vmatprep.subr.bf16.mxu0 0
      %2108 = vmatpush1.bf16.msra.mxu0 %v2084
      %2109 = vmatprep.subr.bf16.mxu0 0
      %2110 = vmatpush1.bf16.msra.mxu0 %v2085
      %2111 = vmatprep.subr.bf16.mxu0 0
      %2112 = vmatpush1.bf16.msra.mxu0 %v2086
      %2113 = vmatprep.subr.bf16.mxu0 0
      %2114 = vmatpush1.bf16.msra.mxu0 %v2087
      %2115 = vmatprep.subr.bf16.mxu0 0
      %2116 = vmatpush1.bf16.msra.mxu0 %v2088
      %2117 = vmatprep.subr.bf16.mxu0 0
      %2118 = vmatpush1.bf16.msra.mxu0 %v2089
      %2119 = vmatprep.subr.bf16.mxu0 0
      %2120 = vmatpush1.bf16.msra.mxu0 %v2090
      %2121 = vmatprep.subr.bf16.mxu0 0
      %2122 = vmatpush1.bf16.msra.mxu0 %v2091
      %2123 = vmatprep.subr.bf16.mxu0 0
      %2124 = vmatpush1.bf16.msra.mxu0 %v2092
      %2125 = vmatprep.mubr.bf16.mxu0 %v2066
      %2126 = vmatmul.mubr.bf16.gmra.mrb[0].mxu0 %v2065
      %v2127 = vpop.f32.mrb[0].mxu0
      %v2128 = vadd.f32 0.0, %v2127
      %v2129 = vpop.f32.mrb[0].mxu0
      %v2130 = vpop.f32.mrb[0].mxu0
      %v2131 = vadd.f32 0.0, %v2130
      %v2132 = vpop.f32.mrb[0].mxu0
      %2133 = vmatprep.mubr.bf16.mxu0 %v2068
      %2134 = vmatmul.mubr.bf16.gmra.mrb[0].mxu0 %v2067
      %v2135 = vpop.f32.mrb[0].mxu0
      %v2136 = vadd.f32 0.0, %v2135
      %v2137 = vpop.f32.mrb[0].mxu0
      %v2138 = vpop.f32.mrb[0].mxu0
      %v2139 = vadd.f32 0.0, %v2138
      %v2140 = vpop.f32.mrb[0].mxu0
      %2141 = vmatprep.mubr.bf16.mxu0 %v2070
      %2142 = vmatmul.mubr.bf16.gmra.mrb[0].mxu0 %v2069
      %v2143 = vpop.f32.mrb[0].mxu0
      %v2144 = vadd.f32 0.0, %v2143
      %v2145 = vpop.f32.mrb[0].mxu0
      %v2146 = vpop.f32.mrb[0].mxu0
      %v2147 = vadd.f32 0.0, %v2146
      %v2148 = vpop.f32.mrb[0].mxu0
      %2149 = vdwg.mxu0
      %v2150 = vadd.f32 %v2071, %v2128
      %v2151 = vadd.f32 %v2072, %v2131
      %v2152 = vadd.f32 %v2073, %v2136
      %v2153 = vadd.f32 %v2074, %v2139
      %v2154 = vadd.f32 %v2075, %v2144
      %v2155 = vadd.f32 %v2076, %v2147
      %vm2156 = vcmask 261120
      %2157 = vst.msk [vmem:[%s13] sm:$0xff] %vm2156, %v2150
      %2158 = vst.msk [vmem:[%s13 + $0x8] sm:$0xff] %vm2156, %v2151
      %2159 = vst.msk [vmem:[%s13 + $0x10] sm:$0xff] %vm2156, %v2152
      %2160 = vst.msk [vmem:[%s13 + $0x18] sm:$0xff] %vm2156, %v2153
      %2161 = vst.msk [vmem:[%s13 + $0x20] sm:$0xff] %vm2156, %v2154
      %2162 = vst.msk [vmem:[%s13 + $0x28] sm:$0xff] %vm2156, %v2155
      %p2163 = scmp.eq.s32.totalorder %s24, 2
      // Predicated region
      $region77: #{tpu_custom_call.1} parent=71 // pred_check
        %p2164 = pneg %p2163
      $region78: #{tpu_custom_call.1} parent=71 // pred_check_branch
        %2166 = sbr.rel (%p2164) target = $region80
      $region79: #{tpu_custom_call.1} parent=71 // pred_region
        %v2167 = vld [vmem:[%s13] sm:$0xff]
        %v2168 = vld [vmem:[%s13 + $0x8] sm:$0xff]
        %v2169 = vld [vmem:[%s13 + $0x10] sm:$0xff]
        %v2170 = vld [vmem:[%s13 + $0x18] sm:$0xff]
        %v2171 = vld [vmem:[%s13 + $0x20] sm:$0xff]
        %v2172 = vld [vmem:[%s13 + $0x28] sm:$0xff]
        %v2173 = vld [vmem:[%s4] sm:$0xff]
        %v2174 = vld [vmem:[%s4 + $0x8] sm:$0xff]
        %v2175 = vld [vmem:[%s4 + $0x10] sm:$0xff]
        %v2176 = vld [vmem:[%s4 + $0x18] sm:$0xff]
        %v2177 = vld [vmem:[%s4 + $0x20] sm:$0xff]
        %v2178 = vld [vmem:[%s4 + $0x28] sm:$0xff]
        %2180 = vset.pattern.permute.xlu0 0
        %2181 = vperm.xlu0 %2180, %v2173
        %v2182 = vpop.permute.xlu0 %2181
        %2185 = vset.pattern.permute.xlu0 0
        %2186 = vperm.xlu0 %2185, %v2174
        %v2187 = vpop.permute.xlu0 %2186
        %2190 = vset.pattern.permute.xlu0 0
        %2191 = vperm.xlu0 %2190, %v2175
        %v2192 = vpop.permute.xlu0 %2191
        %2195 = vset.pattern.permute.xlu0 0
        %2196 = vperm.xlu0 %2195, %v2176
        %v2197 = vpop.permute.xlu0 %2196
        %2200 = vset.pattern.permute.xlu0 0
        %2201 = vperm.xlu0 %2200, %v2177
        %v2202 = vpop.permute.xlu0 %2201
        %2205 = vset.pattern.permute.xlu0 0
        %2206 = vperm.xlu0 %2205, %v2178
        %v2207 = vpop.permute.xlu0 %2206
        %v2209 = vmul.f32 %v2167, %v2182
        %v2210 = vmul.f32 %v2168, %v2187
        %v2211 = vmul.f32 %v2169, %v2192
        %v2212 = vmul.f32 %v2170, %v2197
        %v2213 = vmul.f32 %v2171, %v2202
        %v2214 = vmul.f32 %v2172, %v2207
        %v2215 = vld [vmem:[%s3] sm:$0xff]
        %v2216 = vld [vmem:[%s3 + $0x8] sm:$0xff]
        %v2217 = vld [vmem:[%s3 + $0x10] sm:$0xff]
        %v2218 = vld [vmem:[%s3 + $0x18] sm:$0xff]
        %v2219 = vld [vmem:[%s3 + $0x20] sm:$0xff]
        %v2220 = vld [vmem:[%s3 + $0x28] sm:$0xff]
        %v2221 = vld [vmem:[%s11] sm:$0xf]
        %v2223 = vsel %vm1526, %v2215, 0
        %v2226 = vsel %vm1526, %v2216, 0
        %v2229 = vsel %vm1526, %v2217, 0
        %v2232 = vsel %vm1526, %v2218, 0
        %v2235 = vsel %vm1526, %v2219, 0
        %v2238 = vsel %vm1526, %v2220, 0
        %vm2240 = vcmask 1043456
        %v2242 = vsel %vm2240, %v2221, 0
        %2244 = vmatprep.subr.mxu0 0.0
        %2245 = vmatpush1.msra.mxu0 %v2242
        %2246 = vmatprep.subr.mxu0 0.0
        %2247 = vmatpush1.msra.mxu0 0.0
        %2248 = vmatprep.subr.mxu0 0.0
        %2249 = vmatpush1.msra.mxu0 0.0
        %2250 = vmatprep.subr.mxu0 0.0
        %2251 = vmatpush1.msra.mxu0 0.0
        %2252 = vmatprep.subr.mxu0 0.0
        %2253 = vmatpush1.msra.mxu0 0.0
        %2254 = vmatprep.subr.mxu0 0.0
        %2255 = vmatpush1.msra.mxu0 0.0
        %2256 = vmatprep.subr.mxu0 0.0
        %2257 = vmatpush1.msra.mxu0 0.0
        %2258 = vmatprep.subr.mxu0 0.0
        %2259 = vmatpush1.msra.mxu0 0.0
        %2260 = vmatprep.subr.mxu0 0.0
        %2261 = vmatpush1.msra.mxu0 0.0
        %2262 = vmatprep.subr.mxu0 0.0
        %2263 = vmatpush1.msra.mxu0 0.0
        %2264 = vmatprep.subr.mxu0 0.0
        %2265 = vmatpush1.msra.mxu0 0.0
        %2266 = vmatprep.subr.mxu0 0.0
        %2267 = vmatpush1.msra.mxu0 0.0
        %2268 = vmatprep.subr.mxu0 0.0
        %2269 = vmatpush1.msra.mxu0 0.0
        %2270 = vmatprep.subr.mxu0 0.0
        %2271 = vmatpush1.msra.mxu0 0.0
        %2272 = vmatprep.subr.mxu0 0.0
        %2273 = vmatpush1.msra.mxu0 0.0
        %2274 = vmatprep.subr.mxu0 0.0
        %2275 = vmatpush1.msra.mxu0 0.0
        %2276 = vmatprep.subr.mxu0 0.0
        %2277 = vmatpush1.msra.mxu0 0.0
        %2278 = vmatprep.subr.mxu0 0.0
        %2279 = vmatpush1.msra.mxu0 0.0
        %2280 = vmatprep.subr.mxu0 0.0
        %2281 = vmatpush1.msra.mxu0 0.0
        %2282 = vmatprep.subr.mxu0 0.0
        %2283 = vmatpush1.msra.mxu0 0.0
        %2284 = vmatprep.subr.mxu0 0.0
        %2285 = vmatpush1.msra.mxu0 0.0
        %2286 = vmatprep.subr.mxu0 0.0
        %2287 = vmatpush1.msra.mxu0 0.0
        %2288 = vmatprep.subr.mxu0 0.0
        %2289 = vmatpush1.msra.mxu0 0.0
        %2290 = vmatprep.subr.mxu0 0.0
        %2291 = vmatpush1.msra.mxu0 0.0
        %2292 = vmatprep.subr.mxu0 0.0
        %2293 = vmatpush1.msra.mxu0 0.0
        %2294 = vmatprep.subr.mxu0 0.0
        %2295 = vmatpush1.msra.mxu0 0.0
        %2296 = vmatprep.subr.mxu0 0.0
        %2297 = vmatpush1.msra.mxu0 0.0
        %2298 = vmatprep.subr.mxu0 0.0
        %2299 = vmatpush1.msra.mxu0 0.0
        %2300 = vmatprep.subr.mxu0 0.0
        %2301 = vmatpush1.msra.mxu0 0.0
        %2302 = vmatprep.subr.mxu0 0.0
        %2303 = vmatpush1.msra.mxu0 0.0
        %2304 = vmatprep.subr.mxu0 0.0
        %2305 = vmatpush1.msra.mxu0 0.0
        %2306 = vmatprep.subr.mxu0 0.0
        %2307 = vmatpush1.msra.mxu0 0.0
        %2308 = vmatprep.mubr.f32.mxu0 0.0
        %2309 = vmatmul.mubr.f32.gmra.mrb[0].mxu0 %v2223
        %v2310 = vpop.f32.mrb[0].mxu0
        %v2311 = vadd.f32 0.0, %v2310
        %v2312 = vpop.f32.mrb[0].mxu0
        %2313 = vmatprep.mubr.f32.mxu0 0.0
        %2314 = vmatmul.mubr.f32.gmra.mrb[0].mxu0 %v2226
        %v2315 = vpop.f32.mrb[0].mxu0
        %v2316 = vadd.f32 0.0, %v2315
        %v2317 = vpop.f32.mrb[0].mxu0
        %2318 = vmatprep.mubr.f32.mxu0 0.0
        %2319 = vmatmul.mubr.f32.gmra.mrb[0].mxu0 %v2229
        %v2320 = vpop.f32.mrb[0].mxu0
        %v2321 = vadd.f32 0.0, %v2320
        %v2322 = vpop.f32.mrb[0].mxu0
        %2323 = vmatprep.mubr.f32.mxu0 0.0
        %2324 = vmatmul.mubr.f32.gmra.mrb[0].mxu0 %v2232
        %v2325 = vpop.f32.mrb[0].mxu0
        %v2326 = vadd.f32 0.0, %v2325
        %v2327 = vpop.f32.mrb[0].mxu0
        %2328 = vmatprep.mubr.f32.mxu0 0.0
        %2329 = vmatmul.mubr.f32.gmra.mrb[0].mxu0 %v2235
        %v2330 = vpop.f32.mrb[0].mxu0
        %v2331 = vadd.f32 0.0, %v2330
        %v2332 = vpop.f32.mrb[0].mxu0
        %2333 = vmatprep.mubr.f32.mxu0 0.0
        %2334 = vmatmul.mubr.f32.gmra.mrb[0].mxu0 %v2238
        %v2335 = vpop.f32.mrb[0].mxu0
        %v2336 = vadd.f32 0.0, %v2335
        %v2337 = vpop.f32.mrb[0].mxu0
        %2338 = vdwg.mxu0
        %v2339 = vadd.f32 %v2209, %v2311
        %v2340 = vadd.f32 %v2210, %v2316
        %v2341 = vadd.f32 %v2211, %v2321
        %v2342 = vadd.f32 %v2212, %v2326
        %v2343 = vadd.f32 %v2213, %v2331
        %v2344 = vadd.f32 %v2214, %v2336
        %v2345 = vld [vmem:[%s12] sm:$0x1]
        %v2347 = vlaneseq
        %v2348 = vshrl.u32 %v2347, 7
        %v2349 = vsub.s32 0, %v2348
        %v2350 = vrot.slane %v2345, %v2349
        %v2352 = vadd.f32 %v2339, %v2350
        %v2353 = vadd.f32 %v2340, %v2350
        %v2354 = vadd.f32 %v2341, %v2350
        %v2355 = vadd.f32 %v2342, %v2350
        %v2356 = vadd.f32 %v2343, %v2350
        %v2357 = vadd.f32 %v2344, %v2350
        %v2358 = vmax.f32 %v2352, 0.0
        %v2359 = vmax.f32 %v2353, 0.0
        %v2360 = vmax.f32 %v2354, 0.0
        %v2361 = vmax.f32 %v2355, 0.0
        %v2362 = vmax.f32 %v2356, 0.0
        %v2363 = vmax.f32 %v2357, 0.0
        %2364 = vst.msk [vmem:[%s13] sm:$0xff] %vm2156, %v2358
        %2365 = vst.msk [vmem:[%s13 + $0x8] sm:$0xff] %vm2156, %v2359
        %2366 = vst.msk [vmem:[%s13 + $0x10] sm:$0xff] %vm2156, %v2360
        %2367 = vst.msk [vmem:[%s13 + $0x18] sm:$0xff] %vm2156, %v2361
        %2368 = vst.msk [vmem:[%s13 + $0x20] sm:$0xff] %vm2156, %v2362
        %2369 = vst.msk [vmem:[%s13 + $0x28] sm:$0xff] %vm2156, %v2363
      $region80: #{tpu_custom_call.1} parent=71 // pred_fallthru
        _
      // Predicated region
      $region81: #{tpu_custom_call.1} parent=71 // pred_check
        %p2370 = pneg %p325
      $region82: #{tpu_custom_call.1} parent=71 // pred_check_branch
        %2372 = sbr.rel (%p2370) target = $region84
      $region83: #{tpu_custom_call.1} parent=71 // pred_region
        _
      $region84: #{tpu_custom_call.1} parent=71 // pred_fallthru
        _
      // Predicated region
      $region85: #{tpu_custom_call.1} parent=71 // pred_check
        %p2373 = pneg %p325
      $region86: #{tpu_custom_call.1} parent=71 // pred_check_branch
        %2375 = sbr.rel (%p2373) target = $region88
      $region87: #{tpu_custom_call.1} parent=71 // pred_region
        _
      $region88: #{tpu_custom_call.1} parent=71 // pred_fallthru
        _
    $region72: #{tpu_custom_call.1} parent=5 // pred_fallthru
      _
    %p2376 = scmp.le.s32.totalorder 2, %s19
    // Predicated region
    $region89: #{tpu_custom_call.1} parent=5 // pred_check
      %p2377 = pneg %p2376
    $region90: #{tpu_custom_call.1} parent=5 // pred_check_branch
      %2379 = sbr.rel (%p2377) target = $region92
    $region91: #{tpu_custom_call.1} parent=5 // pred_region
      %s2380 = ssub.s32 %s19, 2
    $region92: #{tpu_custom_call.1} parent=5 // pred_fallthru
      _
  $region6: #{tpu_custom_call.1} parent=0 // loop_footer
    %s23 = sadd.s32 1, %s19
  $region7: #{tpu_custom_call.1} parent=0 // loop_footer_branch
    %18 = sbr.rel target = $region3
  $region8: #{tpu_custom_call.1} parent=0 // loop_exit
    _

</llo_original>
